<compile_context>
chip_gen: v7x
topology: tpu7x:2x2x1
jax: 0.10.0
libtpu: 0.0.40
codegen_flags: <defaults>
</compile_context>

<pallas_src>
import math

import jax
import jax.numpy as jnp
from jax.experimental import pallas as pl
from jax.experimental.pallas import tpu as pltpu

KERNEL_SIZE_LAYER = [7, 7]          # as in the PyTorch file
BN_EPS = 1e-5


def calculate_image_size_after_conv_block(input_size, kernel_size=3, stride=1, padding=1):
    conv_size = (input_size - kernel_size + 2 * padding) // stride + 1
    after_pool = math.ceil((conv_size - 2) / 2) + 1
    return after_pool


def _round_up(v, m):
    return ((v + m - 1) // m) * m


# ----------------------------------------------------------------------------
# Pallas kernel
# ----------------------------------------------------------------------------
def _fused_vconv_kernel(wT_ref, slabT_ref, shift_ref, out_ref):
    """One VConv2d + BatchNorm + ReLU block, fully fused.

    wT    : (Cout, Kt_pad)     bf16 — sub-conv weights with wfm[s] AND bn_scale folded in
    slabT : (Kt_pad, rows_pad) bf16 — concatenated im2col patches, lane-dense rows
    shift : (Cout, 1)          f32  — folded conv-bias + BatchNorm shift
    out   : (Cout, rows_pad)   bf16 — lane-dense (pixels on the lane dimension)
    """
    acc = jnp.dot(wT_ref[...], slabT_ref[...], preferred_element_type=jnp.float32)
    out_ref[...] = jnp.maximum(acc + shift_ref[...], 0.0).astype(out_ref.dtype)


# ----------------------------------------------------------------------------
# Layer wrappers
# ----------------------------------------------------------------------------
def _maxpool2x2_ceil(x):
    # 2x2 ceil-mode max-pool kept in XLA glue — it moves <60 KB (bf16 now) and a
    # separate Pallas call would only add launch overhead.  -inf padding is safe
    # because the input is post-ReLU (>= 0).  (ceil vs. floor agree for the 28->14
    # and 10->5 sizes produced here.)
    n, h, w, c = x.shape
    hp = ((h + 1) // 2) * 2
    wp = ((w + 1) // 2) * 2
    if (hp, wp) != (h, w):   # ceil_mode padding
        x = jnp.pad(x, ((0, 0), (0, hp - h), (0, wp - w), (0, 0)),
                    constant_values=-jnp.inf)
    x = x.reshape(n, hp // 2, 2, wp // 2, 2, c)
    return jnp.max(x, axis=(2, 4))


def vconv_bn_relu_pool(x_nhwc, weight, bias, wfm, bn_scale, bn_shift, padding=1):
    """VConv2d(padding=1) -> BatchNorm2d(eval) -> ReLU -> MaxPool2d(2,2): one Pallas call."""
    n, h, w, cin = x_nhwc.shape
    cout, _, kfull, _ = weight.shape
    s_num = (kfull + 1) // 2                       # int(ceil(k/2))
    hout = h - kfull + 2 * padding + 1
    wout = w - kfull + 2 * padding + 1
    rows = n * hout * wout
    rows_pad = _round_up(rows, 128)                # lane-dense, unmasked stores

    # self.weightFeatureMap.data = data / sum(data)  (functional equivalent)
    wfm = wfm / jnp.sum(wfm)

    # Channel-major transpose ONCE on the ~14 KB input so the slab is built directly
    # in (Kt, rows) layout — no 0.8 MB slab transpose.
    x_cm = jnp.transpose(x_nhwc.astype(jnp.bfloat16), (3, 0, 1, 2))   # (Cin, N, H, W)

    # Build the concatenated im2col slab (trace time / XLA) and fold wfm[s] AND
    # bn_scale into the matching weight slice (delta=0, g=2 -> only start=0 sub-convs).
    slab_parts, wt_parts = [], []
    for s in range(s_num):
        k = kfull - 2 * s
        if padding - s < 0:
            # Matches the PyTorch branch exactly: crop the input spatially by s,
            # then run the sub-conv with padding=1 (zero ring around the crop).
            xs = x_cm[:, :, s:h - s, s:w - s]
            p_s = 1
        else:
            xs = x_cm
            p_s = padding - s
        xp = jnp.pad(xs, ((0, 0), (0, 0), (p_s, p_s), (p_s, p_s)))
        for ky in range(k):
            for kx in range(k):
                sl = xp[:, :, ky:ky + hout, kx:kx + wout].reshape(cin, rows)
                slab_parts.append(sl)                                  # (Cin, rows)
        w_s = weight[:, :, s:kfull - s, s:kfull - s]                   # (Cout, Cin, k, k)
        w_s = jnp.transpose(w_s, (0, 2, 3, 1)).reshape(cout, k * k * cin)   # (ky,kx,c)
        wt_parts.append(((wfm[s] * bn_scale[:, None]) * w_s).astype(jnp.bfloat16))

    kt = cin * sum((kfull - 2 * s) ** 2 for s in range(s_num))
    kt_pad = _round_up(kt, 256)                    # full MXU weight tiles (v6e/v7x)
    if kt_pad > kt:
        # Zero contraction rows/cols: free inside the same concat, exact numerically.
        slab_parts.append(jnp.zeros((kt_pad - kt, rows), jnp.bfloat16))
        wt_parts.append(jnp.zeros((cout, kt_pad - kt), jnp.bfloat16))

    slab_t = jnp.concatenate(slab_parts, axis=0)                       # (Kt_pad, rows)
    if rows_pad > rows:
        # TODO(synk): one small extra pad copy; could be folded into the concat
        # operands if it ever shows up in a trace.
        slab_t = jnp.pad(slab_t, ((0, 0), (0, rows_pad - rows)))
    w_t = jnp.concatenate(wt_parts, axis=-1)                           # (Cout, Kt_pad)

    # Normalized wfm sums to 1, so sum_s wfm[s]*(conv_s + bias) = fused_conv + bias;
    # bias and the BN affine fold into one per-channel shift (scale lives in w_t now).
    shift = (bn_scale * bias + bn_shift).reshape(cout, 1).astype(jnp.float32)

    # Whole-array blocks in VMEM: layer-1 footprint is ~0.9 MB (bf16 slab + bf16 out),
    # far below the scoped-VMEM default on v5e/v6e/v7x, so no row tiling / grid is
    # needed here.  (For larger H*W or batch: tile `rows` in 128-multiple lane blocks,
    # TILE_R <= 4096 at Kt=768 for v7x's 32 MiB scoped VMEM, axis "parallel".)
    conv_t = pl.pallas_call(
        _fused_vconv_kernel,
        out_shape=jax.ShapeDtypeStruct((cout, rows_pad), jnp.bfloat16),
        in_specs=[pl.BlockSpec(memory_space=pltpu.MemorySpace.VMEM)] * 3,
        out_specs=pl.BlockSpec(memory_space=pltpu.MemorySpace.VMEM),
    )(w_t, slab_t, shift)

    conv_nhwc = conv_t[:, :rows].reshape(cout, n, hout, wout).transpose(1, 2, 3, 0)
    return _maxpool2x2_ceil(conv_nhwc)


# ----------------------------------------------------------------------------
# Model
# ----------------------------------------------------------------------------
def student_net2_forward(x_nchw, params):
    x = jnp.transpose(x_nchw, (0, 2, 3, 1))            # NCHW -> NHWC
    for layer in params["features"]:
        x = vconv_bn_relu_pool(x, layer["weight"], layer["bias"], layer["wfm"],
                               layer["bn_scale"], layer["bn_shift"])
    n = x.shape[0]
    # match torch x.view(N, -1) flattening order on NCHW
    x = jnp.transpose(x, (0, 3, 1, 2)).reshape(n, -1).astype(jnp.float32)
    # Final Linear stays in XLA: (N, 225) x (225, num_classes) is too small to
    # amortize a pallas_call, and its 8-wide output store would be fully masked.
    return jnp.dot(x, params["fc_w_t"]) + params["fc_b"]


def init_params(key, in_channels=3, num_classes=8, input_image_size=32):
    # features = [VConv2d(3,9,7,p=1), BN(9), ReLU, MaxPool] x 2  (9 final channels,
    # matching the classifier's featureSize*featureSize*9 input).
    channels = [in_channels, 9, 9]
    keys = jax.random.split(key, len(KERNEL_SIZE_LAYER) + 1)
    features = []
    for li, k in enumerate(KERNEL_SIZE_LAYER):
        cin, cout = channels[li], channels[li + 1]
        fan_out = cout * k * k
        w = jax.random.normal(keys[li], (cout, cin, k, k), jnp.float32) * math.sqrt(2.0 / fan_out)
        b = jnp.zeros((cout,), jnp.float32)             # constant_(bias, 0)
        s_num = (k + 1) // 2
        wfm = jnp.full((s_num,), 1.0 / s_num, jnp.float32)
        gamma = jnp.ones((cout,), jnp.float32)          # BN weight = 1
        beta = jnp.zeros((cout,), jnp.float32)          # BN bias = 0
        r_mean = jnp.zeros((cout,), jnp.float32)        # eval-mode running stats
        r_var = jnp.ones((cout,), jnp.float32)
        bn_scale = gamma / jnp.sqrt(r_var + BN_EPS)
        bn_shift = beta - r_mean * bn_scale
        features.append(dict(weight=w, bias=b, wfm=wfm,
                             bn_scale=bn_scale, bn_shift=bn_shift))

    s = input_image_size
    for k in KERNEL_SIZE_LAYER:
        s = calculate_image_size_after_conv_block(s, kernel_size=k)
    in_feat = s * s * channels[-1]
    fc_w = jax.random.normal(keys[-1], (num_classes, in_feat), jnp.float32) * 0.01
    fc_b = jnp.zeros((num_classes,), jnp.float32)
    return dict(features=features, fc_w_t=fc_w.T, fc_b=fc_b)


if __name__ == "__main__":
    key = jax.random.PRNGKey(0)
    pkey, xkey = jax.random.split(key)

    input_image_size = 32           # 32 -> conv 28 -> pool 14 -> conv 10 -> pool 5
    num_classes = 8
    params = init_params(pkey, in_channels=3, num_classes=num_classes,
                         input_image_size=input_image_size)

    x = jax.random.normal(xkey, (2, 3, input_image_size, input_image_size), jnp.float32)

    fwd = jax.jit(student_net2_forward)
    out = fwd(x, params)
    jax.block_until_ready(out)
    assert out.shape == (2, num_classes), out.shape
    print("KERNEL_OK")
</pallas_src>

<mosaic_0001>
module attributes {stable_mosaic.version = 11 : i64} {
  func.func @_fused_vconv_kernel(%arg0: memref<9x256xbf16, #tpu.memory_space<vmem>>, %arg1: memref<256x1664xbf16, #tpu.memory_space<vmem>>, %arg2: memref<9x1xf32, #tpu.memory_space<vmem>>, %arg3: memref<9x1664xbf16, #tpu.memory_space<vmem>>) attributes {dimension_semantics = [], scalar_prefetch = 0 : i64, scratch_operands = 0 : i64, tpu.core_type = #tpu.core_type<tc>} {
    %c0 = arith.constant 0 : index
    %c0_0 = arith.constant 0 : index
    %0 = vector.load %arg0[%c0, %c0_0] : memref<9x256xbf16, #tpu.memory_space<vmem>>, vector<9x256xbf16>
    %c0_1 = arith.constant 0 : index
    %c0_2 = arith.constant 0 : index
    %1 = vector.load %arg1[%c0_1, %c0_2] : memref<256x1664xbf16, #tpu.memory_space<vmem>>, vector<256x1664xbf16>
    %cst = arith.constant dense<0.000000e+00> : vector<9x1664xf32>
    %2 = tpu.matmul %0, %1, %cst {dimension_numbers = #tpu.dot_dimension_numbers<[1], [0], [0], [1], [0, 0, 1, 1], [], []>} : vector<9x256xbf16>, vector<256x1664xbf16>, vector<9x1664xf32> -> vector<9x1664xf32>
    %c0_3 = arith.constant 0 : index
    %c0_4 = arith.constant 0 : index
    %3 = vector.load %arg2[%c0_3, %c0_4] : memref<9x1xf32, #tpu.memory_space<vmem>>, vector<9x1xf32>
    %4 = vector.broadcast %3 : vector<9x1xf32> to vector<9x1664xf32>
    %5 = arith.addf %2, %4 : vector<9x1664xf32>
    %cst_5 = arith.constant 0.000000e+00 : f32
    %6 = vector.broadcast %cst_5 : f32 to vector<9x1664xf32>
    %7 = arith.maximumf %5, %6 : vector<9x1664xf32>
    %8 = arith.truncf %7 : vector<9x1664xf32> to vector<9x1664xbf16>
    %c0_6 = arith.constant 0 : index
    %c0_7 = arith.constant 0 : index
    %9 = vector.load %arg3[%c0_6, %c0_7] : memref<9x1664xbf16, #tpu.memory_space<vmem>>, vector<9x1664xbf16>
    tpu.vector_store %arg3[%c0_6, %c0_7], %8 {strides = array<i32>} : memref<9x1664xbf16, #tpu.memory_space<vmem>>, vector<9x1664xbf16>,
    return
  }
}

module attributes {stable_mosaic.version = 11 : i64} {
  func.func @_fused_vconv_kernel(%arg0: memref<9x768xbf16, #tpu.memory_space<vmem>>, %arg1: memref<768x256xbf16, #tpu.memory_space<vmem>>, %arg2: memref<9x1xf32, #tpu.memory_space<vmem>>, %arg3: memref<9x256xbf16, #tpu.memory_space<vmem>>) attributes {dimension_semantics = [], scalar_prefetch = 0 : i64, scratch_operands = 0 : i64, tpu.core_type = #tpu.core_type<tc>} {
    %c0 = arith.constant 0 : index
    %c0_0 = arith.constant 0 : index
    %0 = vector.load %arg0[%c0, %c0_0] : memref<9x768xbf16, #tpu.memory_space<vmem>>, vector<9x768xbf16>
    %c0_1 = arith.constant 0 : index
    %c0_2 = arith.constant 0 : index
    %1 = vector.load %arg1[%c0_1, %c0_2] : memref<768x256xbf16, #tpu.memory_space<vmem>>, vector<768x256xbf16>
    %cst = arith.constant dense<0.000000e+00> : vector<9x256xf32>
    %2 = tpu.matmul %0, %1, %cst {dimension_numbers = #tpu.dot_dimension_numbers<[1], [0], [0], [1], [0, 0, 1, 1], [], []>} : vector<9x768xbf16>, vector<768x256xbf16>, vector<9x256xf32> -> vector<9x256xf32>
    %c0_3 = arith.constant 0 : index
    %c0_4 = arith.constant 0 : index
    %3 = vector.load %arg2[%c0_3, %c0_4] : memref<9x1xf32, #tpu.memory_space<vmem>>, vector<9x1xf32>
    %4 = vector.broadcast %3 : vector<9x1xf32> to vector<9x256xf32>
    %5 = arith.addf %2, %4 : vector<9x256xf32>
    %cst_5 = arith.constant 0.000000e+00 : f32
    %6 = vector.broadcast %cst_5 : f32 to vector<9x256xf32>
    %7 = arith.maximumf %5, %6 : vector<9x256xf32>
    %8 = arith.truncf %7 : vector<9x256xf32> to vector<9x256xbf16>
    %c0_6 = arith.constant 0 : index
    %c0_7 = arith.constant 0 : index
    %9 = vector.load %arg3[%c0_6, %c0_7] : memref<9x256xbf16, #tpu.memory_space<vmem>>, vector<9x256xbf16>
    tpu.vector_store %arg3[%c0_6, %c0_7], %8 {strides = array<i32>} : memref<9x256xbf16, #tpu.memory_space<vmem>>, vector<9x256xbf16>,
    return
  }
}

</mosaic_0001>

<llo_original>
// kernel: student_net2_forward.2
$region0: #{student_net2_forward.2}
  #allocation0 [shape = 'u32[]', space=smem, size = 0x4, offset = 0x4, fixed_abs, tag = 'smem constant byte address 0x4 - core index']
  #allocation1 [shape = 'u32[144,128]{1,0:T(1,128)}', space=vmem, size = 0x12000, scoped, tag = 'internal scratch']
  %s0 = inlined_call_operand.vmem [shape: bf16[9,256], index: 0, kind: input, shape index: {}]
  %s1 = inlined_call_operand.vmem [shape: bf16[256,1664], index: 1, kind: input, shape index: {}]
  %s2 = inlined_call_operand.vmem [shape: f32[9,1], index: 2, kind: input, shape index: {}]
  %s3 = inlined_call_operand.vmem [shape: bf16[9,1664], index: 3, kind: output, shape index: {}]
  %s4 = sld [smem:[#allocation0]]
  $region22: #{student_net2_forward.2} parent=0
    _
  %s6 = ssub.s32 1, %s4
  %s7 = scalar_select 0, %s6, %s4
  // Predicated region
  $region2: #{student_net2_forward.2} parent=0 // pred_check
    _
  $region3: #{student_net2_forward.2} parent=0 // pred_check_branch
    %9 = sbr.rel (0) target = $region5
  $region4: #{student_net2_forward.2} parent=0 // pred_region
    _
  $region5: #{student_net2_forward.2} parent=0 // pred_fallthru
    _
  // Predicated region
  $region6: #{student_net2_forward.2} parent=0 // pred_check
    _
  $region7: #{student_net2_forward.2} parent=0 // pred_check_branch
    %11 = sbr.rel (0) target = $region9
  $region8: #{student_net2_forward.2} parent=0 // pred_region
    _
  $region9: #{student_net2_forward.2} parent=0 // pred_fallthru
    _
  // Predicated region
  $region10: #{student_net2_forward.2} parent=0 // pred_check
    _
  $region11: #{student_net2_forward.2} parent=0 // pred_check_branch
    %13 = sbr.rel (0) target = $region13
  $region12: #{student_net2_forward.2} parent=0 // pred_region
    _
  $region13: #{student_net2_forward.2} parent=0 // pred_fallthru
    _
  %v15 = vld [vmem:[%s0] sm:$0xff]
  %v16 = vld [vmem:[%s0 + $0x8] sm:$0x11]
  %v17 = vld [vmem:[%s1] sm:$0xff]
  %v18 = vld [vmem:[%s1 + $0x8] sm:$0xff]
  %v19 = vld [vmem:[%s1 + $0x10] sm:$0xff]
  %v20 = vld [vmem:[%s1 + $0x18] sm:$0xff]
  %v21 = vld [vmem:[%s1 + $0x20] sm:$0xff]
  %v22 = vld [vmem:[%s1 + $0x28] sm:$0xff]
  %v23 = vld [vmem:[%s1 + $0x30] sm:$0xf]
  %v24 = vld [vmem:[%s1 + $0x34] sm:$0xff]
  %v25 = vld [vmem:[%s1 + $0x3c] sm:$0xff]
  %v26 = vld [vmem:[%s1 + $0x44] sm:$0xff]
  %v27 = vld [vmem:[%s1 + $0x4c] sm:$0xff]
  %v28 = vld [vmem:[%s1 + $0x54] sm:$0xff]
  %v29 = vld [vmem:[%s1 + $0x5c] sm:$0xff]
  %v30 = vld [vmem:[%s1 + $0x64] sm:$0xf]
  %v31 = vld [vmem:[%s1 + $0x68] sm:$0xff]
  %v32 = vld [vmem:[%s1 + $0x70] sm:$0xff]
  %v33 = vld [vmem:[%s1 + $0x78] sm:$0xff]
  %v34 = vld [vmem:[%s1 + $0x80] sm:$0xff]
  %v35 = vld [vmem:[%s1 + $0x88] sm:$0xff]
  %v36 = vld [vmem:[%s1 + $0x90] sm:$0xff]
  %v37 = vld [vmem:[%s1 + $0x98] sm:$0xf]
  %v38 = vld [vmem:[%s1 + $0x9c] sm:$0xff]
  %v39 = vld [vmem:[%s1 + $0xa4] sm:$0xff]
  %v40 = vld [vmem:[%s1 + $0xac] sm:$0xff]
  %v41 = vld [vmem:[%s1 + $0xb4] sm:$0xff]
  %v42 = vld [vmem:[%s1 + $0xbc] sm:$0xff]
  %v43 = vld [vmem:[%s1 + $0xc4] sm:$0xff]
  %v44 = vld [vmem:[%s1 + $0xcc] sm:$0xf]
  %v45 = vld [vmem:[%s1 + $0xd0] sm:$0xff]
  %v46 = vld [vmem:[%s1 + $0xd8] sm:$0xff]
  %v47 = vld [vmem:[%s1 + $0xe0] sm:$0xff]
  %v48 = vld [vmem:[%s1 + $0xe8] sm:$0xff]
  %v49 = vld [vmem:[%s1 + $0xf0] sm:$0xff]
  %v50 = vld [vmem:[%s1 + $0xf8] sm:$0xff]
  %v51 = vld [vmem:[%s1 + $0x100] sm:$0xf]
  %v52 = vld [vmem:[%s1 + $0x104] sm:$0xff]
  %v53 = vld [vmem:[%s1 + $0x10c] sm:$0xff]
  %v54 = vld [vmem:[%s1 + $0x114] sm:$0xff]
  %v55 = vld [vmem:[%s1 + $0x11c] sm:$0xff]
  %v56 = vld [vmem:[%s1 + $0x124] sm:$0xff]
  %v57 = vld [vmem:[%s1 + $0x12c] sm:$0xff]
  %v58 = vld [vmem:[%s1 + $0x134] sm:$0xf]
  %v59 = vld [vmem:[%s1 + $0x138] sm:$0xff]
  %v60 = vld [vmem:[%s1 + $0x140] sm:$0xff]
  %v61 = vld [vmem:[%s1 + $0x148] sm:$0xff]
  %v62 = vld [vmem:[%s1 + $0x150] sm:$0xff]
  %v63 = vld [vmem:[%s1 + $0x158] sm:$0xff]
  %v64 = vld [vmem:[%s1 + $0x160] sm:$0xff]
  %v65 = vld [vmem:[%s1 + $0x168] sm:$0xf]
  %v66 = vld [vmem:[%s1 + $0x16c] sm:$0xff]
  %v67 = vld [vmem:[%s1 + $0x174] sm:$0xff]
  %v68 = vld [vmem:[%s1 + $0x17c] sm:$0xff]
  %v69 = vld [vmem:[%s1 + $0x184] sm:$0xff]
  %v70 = vld [vmem:[%s1 + $0x18c] sm:$0xff]
  %v71 = vld [vmem:[%s1 + $0x194] sm:$0xff]
  %v72 = vld [vmem:[%s1 + $0x19c] sm:$0xf]
  %v73 = vld [vmem:[%s1 + $0x1a0] sm:$0xff]
  %v74 = vld [vmem:[%s1 + $0x1a8] sm:$0xff]
  %v75 = vld [vmem:[%s1 + $0x1b0] sm:$0xff]
  %v76 = vld [vmem:[%s1 + $0x1b8] sm:$0xff]
  %v77 = vld [vmem:[%s1 + $0x1c0] sm:$0xff]
  %v78 = vld [vmem:[%s1 + $0x1c8] sm:$0xff]
  %v79 = vld [vmem:[%s1 + $0x1d0] sm:$0xf]
  %v80 = vld [vmem:[%s1 + $0x1d4] sm:$0xff]
  %v81 = vld [vmem:[%s1 + $0x1dc] sm:$0xff]
  %v82 = vld [vmem:[%s1 + $0x1e4] sm:$0xff]
  %v83 = vld [vmem:[%s1 + $0x1ec] sm:$0xff]
  %v84 = vld [vmem:[%s1 + $0x1f4] sm:$0xff]
  %v85 = vld [vmem:[%s1 + $0x1fc] sm:$0xff]
  %v86 = vld [vmem:[%s1 + $0x204] sm:$0xf]
  %v87 = vld [vmem:[%s1 + $0x208] sm:$0xff]
  %v88 = vld [vmem:[%s1 + $0x210] sm:$0xff]
  %v89 = vld [vmem:[%s1 + $0x218] sm:$0xff]
  %v90 = vld [vmem:[%s1 + $0x220] sm:$0xff]
  %v91 = vld [vmem:[%s1 + $0x228] sm:$0xff]
  %v92 = vld [vmem:[%s1 + $0x230] sm:$0xff]
  %v93 = vld [vmem:[%s1 + $0x238] sm:$0xf]
  %v94 = vld [vmem:[%s1 + $0x23c] sm:$0xff]
  %v95 = vld [vmem:[%s1 + $0x244] sm:$0xff]
  %v96 = vld [vmem:[%s1 + $0x24c] sm:$0xff]
  %v97 = vld [vmem:[%s1 + $0x254] sm:$0xff]
  %v98 = vld [vmem:[%s1 + $0x25c] sm:$0xff]
  %v99 = vld [vmem:[%s1 + $0x264] sm:$0xff]
  %v100 = vld [vmem:[%s1 + $0x26c] sm:$0xf]
  %v101 = vld [vmem:[%s1 + $0x270] sm:$0xff]
  %v102 = vld [vmem:[%s1 + $0x278] sm:$0xff]
  %v103 = vld [vmem:[%s1 + $0x280] sm:$0xff]
  %v104 = vld [vmem:[%s1 + $0x288] sm:$0xff]
  %v105 = vld [vmem:[%s1 + $0x290] sm:$0xff]
  %v106 = vld [vmem:[%s1 + $0x298] sm:$0xff]
  %v107 = vld [vmem:[%s1 + $0x2a0] sm:$0xf]
  %v108 = vld [vmem:[%s1 + $0x2a4] sm:$0xff]
  %v109 = vld [vmem:[%s1 + $0x2ac] sm:$0xff]
  %v110 = vld [vmem:[%s1 + $0x2b4] sm:$0xff]
  %v111 = vld [vmem:[%s1 + $0x2bc] sm:$0xff]
  %v112 = vld [vmem:[%s1 + $0x2c4] sm:$0xff]
  %v113 = vld [vmem:[%s1 + $0x2cc] sm:$0xff]
  %v114 = vld [vmem:[%s1 + $0x2d4] sm:$0xf]
  %v115 = vld [vmem:[%s1 + $0x2d8] sm:$0xff]
  %v116 = vld [vmem:[%s1 + $0x2e0] sm:$0xff]
  %v117 = vld [vmem:[%s1 + $0x2e8] sm:$0xff]
  %v118 = vld [vmem:[%s1 + $0x2f0] sm:$0xff]
  %v119 = vld [vmem:[%s1 + $0x2f8] sm:$0xff]
  %v120 = vld [vmem:[%s1 + $0x300] sm:$0xff]
  %v121 = vld [vmem:[%s1 + $0x308] sm:$0xf]
  %v122 = vld [vmem:[%s1 + $0x30c] sm:$0xff]
  %v123 = vld [vmem:[%s1 + $0x314] sm:$0xff]
  %v124 = vld [vmem:[%s1 + $0x31c] sm:$0xff]
  %v125 = vld [vmem:[%s1 + $0x324] sm:$0xff]
  %v126 = vld [vmem:[%s1 + $0x32c] sm:$0xff]
  %v127 = vld [vmem:[%s1 + $0x334] sm:$0xff]
  %v128 = vld [vmem:[%s1 + $0x33c] sm:$0xf]
  %v129 = vld [vmem:[%s1 + $0x340] sm:$0xff]
  %v130 = vld [vmem:[%s1 + $0x348] sm:$0xff]
  %v131 = vld [vmem:[%s1 + $0x350] sm:$0xff]
  %v132 = vld [vmem:[%s1 + $0x358] sm:$0xff]
  %v133 = vld [vmem:[%s1 + $0x360] sm:$0xff]
  %v134 = vld [vmem:[%s1 + $0x368] sm:$0xff]
  %v135 = vld [vmem:[%s1 + $0x370] sm:$0xf]
  %v136 = vld [vmem:[%s1 + $0x374] sm:$0xff]
  %v137 = vld [vmem:[%s1 + $0x37c] sm:$0xff]
  %v138 = vld [vmem:[%s1 + $0x384] sm:$0xff]
  %v139 = vld [vmem:[%s1 + $0x38c] sm:$0xff]
  %v140 = vld [vmem:[%s1 + $0x394] sm:$0xff]
  %v141 = vld [vmem:[%s1 + $0x39c] sm:$0xff]
  %v142 = vld [vmem:[%s1 + $0x3a4] sm:$0xf]
  %v143 = vld [vmem:[%s1 + $0x3a8] sm:$0xff]
  %v144 = vld [vmem:[%s1 + $0x3b0] sm:$0xff]
  %v145 = vld [vmem:[%s1 + $0x3b8] sm:$0xff]
  %v146 = vld [vmem:[%s1 + $0x3c0] sm:$0xff]
  %v147 = vld [vmem:[%s1 + $0x3c8] sm:$0xff]
  %v148 = vld [vmem:[%s1 + $0x3d0] sm:$0xff]
  %v149 = vld [vmem:[%s1 + $0x3d8] sm:$0xf]
  %v150 = vld [vmem:[%s1 + $0x3dc] sm:$0xff]
  %v151 = vld [vmem:[%s1 + $0x3e4] sm:$0xff]
  %v152 = vld [vmem:[%s1 + $0x3ec] sm:$0xff]
  %v153 = vld [vmem:[%s1 + $0x3f4] sm:$0xff]
  %v154 = vld [vmem:[%s1 + $0x3fc] sm:$0xff]
  %v155 = vld [vmem:[%s1 + $0x404] sm:$0xff]
  %v156 = vld [vmem:[%s1 + $0x40c] sm:$0xf]
  %v157 = vld [vmem:[%s1 + $0x410] sm:$0xff]
  %v158 = vld [vmem:[%s1 + $0x418] sm:$0xff]
  %v159 = vld [vmem:[%s1 + $0x420] sm:$0xff]
  %v160 = vld [vmem:[%s1 + $0x428] sm:$0xff]
  %v161 = vld [vmem:[%s1 + $0x430] sm:$0xff]
  %v162 = vld [vmem:[%s1 + $0x438] sm:$0xff]
  %v163 = vld [vmem:[%s1 + $0x440] sm:$0xf]
  %v164 = vld [vmem:[%s1 + $0x444] sm:$0xff]
  %v165 = vld [vmem:[%s1 + $0x44c] sm:$0xff]
  %v166 = vld [vmem:[%s1 + $0x454] sm:$0xff]
  %v167 = vld [vmem:[%s1 + $0x45c] sm:$0xff]
  %v168 = vld [vmem:[%s1 + $0x464] sm:$0xff]
  %v169 = vld [vmem:[%s1 + $0x46c] sm:$0xff]
  %v170 = vld [vmem:[%s1 + $0x474] sm:$0xf]
  %v171 = vld [vmem:[%s1 + $0x478] sm:$0xff]
  %v172 = vld [vmem:[%s1 + $0x480] sm:$0xff]
  %v173 = vld [vmem:[%s1 + $0x488] sm:$0xff]
  %v174 = vld [vmem:[%s1 + $0x490] sm:$0xff]
  %v175 = vld [vmem:[%s1 + $0x498] sm:$0xff]
  %v176 = vld [vmem:[%s1 + $0x4a0] sm:$0xff]
  %v177 = vld [vmem:[%s1 + $0x4a8] sm:$0xf]
  %v178 = vld [vmem:[%s1 + $0x4ac] sm:$0xff]
  %v179 = vld [vmem:[%s1 + $0x4b4] sm:$0xff]
  %v180 = vld [vmem:[%s1 + $0x4bc] sm:$0xff]
  %v181 = vld [vmem:[%s1 + $0x4c4] sm:$0xff]
  %v182 = vld [vmem:[%s1 + $0x4cc] sm:$0xff]
  %v183 = vld [vmem:[%s1 + $0x4d4] sm:$0xff]
  %v184 = vld [vmem:[%s1 + $0x4dc] sm:$0xf]
  %v185 = vld [vmem:[%s1 + $0x4e0] sm:$0xff]
  %v186 = vld [vmem:[%s1 + $0x4e8] sm:$0xff]
  %v187 = vld [vmem:[%s1 + $0x4f0] sm:$0xff]
  %v188 = vld [vmem:[%s1 + $0x4f8] sm:$0xff]
  %v189 = vld [vmem:[%s1 + $0x500] sm:$0xff]
  %v190 = vld [vmem:[%s1 + $0x508] sm:$0xff]
  %v191 = vld [vmem:[%s1 + $0x510] sm:$0xf]
  %v192 = vld [vmem:[%s1 + $0x514] sm:$0xff]
  %v193 = vld [vmem:[%s1 + $0x51c] sm:$0xff]
  %v194 = vld [vmem:[%s1 + $0x524] sm:$0xff]
  %v195 = vld [vmem:[%s1 + $0x52c] sm:$0xff]
  %v196 = vld [vmem:[%s1 + $0x534] sm:$0xff]
  %v197 = vld [vmem:[%s1 + $0x53c] sm:$0xff]
  %v198 = vld [vmem:[%s1 + $0x544] sm:$0xf]
  %v199 = vld [vmem:[%s1 + $0x548] sm:$0xff]
  %v200 = vld [vmem:[%s1 + $0x550] sm:$0xff]
  %v201 = vld [vmem:[%s1 + $0x558] sm:$0xff]
  %v202 = vld [vmem:[%s1 + $0x560] sm:$0xff]
  %v203 = vld [vmem:[%s1 + $0x568] sm:$0xff]
  %v204 = vld [vmem:[%s1 + $0x570] sm:$0xff]
  %v205 = vld [vmem:[%s1 + $0x578] sm:$0xf]
  %v206 = vld [vmem:[%s1 + $0x57c] sm:$0xff]
  %v207 = vld [vmem:[%s1 + $0x584] sm:$0xff]
  %v208 = vld [vmem:[%s1 + $0x58c] sm:$0xff]
  %v209 = vld [vmem:[%s1 + $0x594] sm:$0xff]
  %v210 = vld [vmem:[%s1 + $0x59c] sm:$0xff]
  %v211 = vld [vmem:[%s1 + $0x5a4] sm:$0xff]
  %v212 = vld [vmem:[%s1 + $0x5ac] sm:$0xf]
  %v213 = vld [vmem:[%s1 + $0x5b0] sm:$0xff]
  %v214 = vld [vmem:[%s1 + $0x5b8] sm:$0xff]
  %v215 = vld [vmem:[%s1 + $0x5c0] sm:$0xff]
  %v216 = vld [vmem:[%s1 + $0x5c8] sm:$0xff]
  %v217 = vld [vmem:[%s1 + $0x5d0] sm:$0xff]
  %v218 = vld [vmem:[%s1 + $0x5d8] sm:$0xff]
  %v219 = vld [vmem:[%s1 + $0x5e0] sm:$0xf]
  %v220 = vld [vmem:[%s1 + $0x5e4] sm:$0xff]
  %v221 = vld [vmem:[%s1 + $0x5ec] sm:$0xff]
  %v222 = vld [vmem:[%s1 + $0x5f4] sm:$0xff]
  %v223 = vld [vmem:[%s1 + $0x5fc] sm:$0xff]
  %v224 = vld [vmem:[%s1 + $0x604] sm:$0xff]
  %v225 = vld [vmem:[%s1 + $0x60c] sm:$0xff]
  %v226 = vld [vmem:[%s1 + $0x614] sm:$0xf]
  %v227 = vld [vmem:[%s1 + $0x618] sm:$0xff]
  %v228 = vld [vmem:[%s1 + $0x620] sm:$0xff]
  %v229 = vld [vmem:[%s1 + $0x628] sm:$0xff]
  %v230 = vld [vmem:[%s1 + $0x630] sm:$0xff]
  %v231 = vld [vmem:[%s1 + $0x638] sm:$0xff]
  %v232 = vld [vmem:[%s1 + $0x640] sm:$0xff]
  %v233 = vld [vmem:[%s1 + $0x648] sm:$0xf]
  %v234 = vld [vmem:[%s1 + $0x64c] sm:$0xff]
  %v235 = vld [vmem:[%s1 + $0x654] sm:$0xff]
  %v236 = vld [vmem:[%s1 + $0x65c] sm:$0xff]
  %v237 = vld [vmem:[%s1 + $0x664] sm:$0xff]
  %v238 = vld [vmem:[%s1 + $0x66c] sm:$0xff]
  %v239 = vld [vmem:[%s1 + $0x674] sm:$0xff]
  %v240 = vld [vmem:[%s1 + $0x67c] sm:$0xf]
  %v241 = vld [vmem:[%s2] sm:$0xff]
  %v242 = vld [vmem:[%s2 + $0x8] sm:$0x1]
  %244 = vset.pattern.permute.xlu0 0
  %245 = vperm.xlu0 %244, %v241
  %v246 = vpop.permute.xlu0 %245
  %249 = vset.pattern.permute.xlu0 0
  %250 = vperm.xlu0 %249, %v242
  %v251 = vpop.permute.xlu0 %250
  %v255 = vunpack.c.l.b16 %v15
  %v256 = vunpack.c.h.b16 %v15
  %v257 = vunpack.c.l.b16 %v16
  %v258 = vunpack.c.h.b16 %v16
  %v259 = vpack.c.b16 %v257, %v255
  %v260 = vpack.c.b16 %v258, %v256
  %v487 = vunpack.c.l.b16 %v17
  %v488 = vunpack.c.h.b16 %v17
  %v489 = vunpack.c.l.b16 %v18
  %v490 = vunpack.c.h.b16 %v18
  %v491 = vunpack.c.l.b16 %v19
  %v492 = vunpack.c.h.b16 %v19
  %v493 = vunpack.c.l.b16 %v20
  %v494 = vunpack.c.h.b16 %v20
  %v495 = vunpack.c.l.b16 %v21
  %v496 = vunpack.c.h.b16 %v21
  %v497 = vunpack.c.l.b16 %v22
  %v498 = vunpack.c.h.b16 %v22
  %v499 = vunpack.c.l.b16 %v23
  %v500 = vunpack.c.l.b16 %v24
  %v501 = vunpack.c.h.b16 %v24
  %v502 = vunpack.c.l.b16 %v25
  %v503 = vunpack.c.h.b16 %v25
  %v504 = vunpack.c.l.b16 %v26
  %v505 = vunpack.c.h.b16 %v26
  %v506 = vunpack.c.l.b16 %v27
  %v507 = vunpack.c.h.b16 %v27
  %v508 = vunpack.c.l.b16 %v28
  %v509 = vunpack.c.h.b16 %v28
  %v510 = vunpack.c.l.b16 %v29
  %v511 = vunpack.c.h.b16 %v29
  %v512 = vunpack.c.l.b16 %v30
  %v513 = vunpack.c.l.b16 %v31
  %v514 = vunpack.c.h.b16 %v31
  %v515 = vunpack.c.l.b16 %v32
  %v516 = vunpack.c.h.b16 %v32
  %v517 = vunpack.c.l.b16 %v33
  %v518 = vunpack.c.h.b16 %v33
  %v519 = vunpack.c.l.b16 %v34
  %v520 = vunpack.c.h.b16 %v34
  %v521 = vunpack.c.l.b16 %v35
  %v522 = vunpack.c.h.b16 %v35
  %v523 = vunpack.c.l.b16 %v36
  %v524 = vunpack.c.h.b16 %v36
  %v525 = vunpack.c.l.b16 %v37
  %v526 = vunpack.c.l.b16 %v38
  %v527 = vunpack.c.h.b16 %v38
  %v528 = vunpack.c.l.b16 %v39
  %v529 = vunpack.c.h.b16 %v39
  %v530 = vunpack.c.l.b16 %v40
  %v531 = vunpack.c.h.b16 %v40
  %v532 = vunpack.c.l.b16 %v41
  %v533 = vunpack.c.h.b16 %v41
  %v534 = vunpack.c.l.b16 %v42
  %v535 = vunpack.c.h.b16 %v42
  %v536 = vunpack.c.l.b16 %v43
  %v537 = vunpack.c.h.b16 %v43
  %v538 = vunpack.c.l.b16 %v44
  %v539 = vunpack.c.l.b16 %v45
  %v540 = vunpack.c.h.b16 %v45
  %v541 = vunpack.c.l.b16 %v46
  %v542 = vunpack.c.h.b16 %v46
  %v543 = vunpack.c.l.b16 %v47
  %v544 = vunpack.c.h.b16 %v47
  %v545 = vunpack.c.l.b16 %v48
  %v546 = vunpack.c.h.b16 %v48
  %v547 = vunpack.c.l.b16 %v49
  %v548 = vunpack.c.h.b16 %v49
  %v549 = vunpack.c.l.b16 %v50
  %v550 = vunpack.c.h.b16 %v50
  %v551 = vunpack.c.l.b16 %v51
  %v552 = vunpack.c.l.b16 %v52
  %v553 = vunpack.c.h.b16 %v52
  %v554 = vunpack.c.l.b16 %v53
  %v555 = vunpack.c.h.b16 %v53
  %v556 = vunpack.c.l.b16 %v54
  %v557 = vunpack.c.h.b16 %v54
  %v558 = vunpack.c.l.b16 %v55
  %v559 = vunpack.c.h.b16 %v55
  %v560 = vunpack.c.l.b16 %v56
  %v561 = vunpack.c.h.b16 %v56
  %v562 = vunpack.c.l.b16 %v57
  %v563 = vunpack.c.h.b16 %v57
  %v564 = vunpack.c.l.b16 %v58
  %v565 = vunpack.c.l.b16 %v59
  %v566 = vunpack.c.h.b16 %v59
  %v567 = vunpack.c.l.b16 %v60
  %v568 = vunpack.c.h.b16 %v60
  %v569 = vunpack.c.l.b16 %v61
  %v570 = vunpack.c.h.b16 %v61
  %v571 = vunpack.c.l.b16 %v62
  %v572 = vunpack.c.h.b16 %v62
  %v573 = vunpack.c.l.b16 %v63
  %v574 = vunpack.c.h.b16 %v63
  %v575 = vunpack.c.l.b16 %v64
  %v576 = vunpack.c.h.b16 %v64
  %v577 = vunpack.c.l.b16 %v65
  %v578 = vunpack.c.l.b16 %v66
  %v579 = vunpack.c.h.b16 %v66
  %v580 = vunpack.c.l.b16 %v67
  %v581 = vunpack.c.h.b16 %v67
  %v582 = vunpack.c.l.b16 %v68
  %v583 = vunpack.c.h.b16 %v68
  %v584 = vunpack.c.l.b16 %v69
  %v585 = vunpack.c.h.b16 %v69
  %v586 = vunpack.c.l.b16 %v70
  %v587 = vunpack.c.h.b16 %v70
  %v588 = vunpack.c.l.b16 %v71
  %v589 = vunpack.c.h.b16 %v71
  %v590 = vunpack.c.l.b16 %v72
  %v591 = vunpack.c.l.b16 %v73
  %v592 = vunpack.c.h.b16 %v73
  %v593 = vunpack.c.l.b16 %v74
  %v594 = vunpack.c.h.b16 %v74
  %v595 = vunpack.c.l.b16 %v75
  %v596 = vunpack.c.h.b16 %v75
  %v597 = vunpack.c.l.b16 %v76
  %v598 = vunpack.c.h.b16 %v76
  %v599 = vunpack.c.l.b16 %v77
  %v600 = vunpack.c.h.b16 %v77
  %v601 = vunpack.c.l.b16 %v78
  %v602 = vunpack.c.h.b16 %v78
  %v603 = vunpack.c.l.b16 %v79
  %v604 = vunpack.c.l.b16 %v80
  %v605 = vunpack.c.h.b16 %v80
  %v606 = vunpack.c.l.b16 %v81
  %v607 = vunpack.c.h.b16 %v81
  %v608 = vunpack.c.l.b16 %v82
  %v609 = vunpack.c.h.b16 %v82
  %v610 = vunpack.c.l.b16 %v83
  %v611 = vunpack.c.h.b16 %v83
  %v612 = vunpack.c.l.b16 %v84
  %v613 = vunpack.c.h.b16 %v84
  %v614 = vunpack.c.l.b16 %v85
  %v615 = vunpack.c.h.b16 %v85
  %v616 = vunpack.c.l.b16 %v86
  %v617 = vunpack.c.l.b16 %v87
  %v618 = vunpack.c.h.b16 %v87
  %v619 = vunpack.c.l.b16 %v88
  %v620 = vunpack.c.h.b16 %v88
  %v621 = vunpack.c.l.b16 %v89
  %v622 = vunpack.c.h.b16 %v89
  %v623 = vunpack.c.l.b16 %v90
  %v624 = vunpack.c.h.b16 %v90
  %v625 = vunpack.c.l.b16 %v91
  %v626 = vunpack.c.h.b16 %v91
  %v627 = vunpack.c.l.b16 %v92
  %v628 = vunpack.c.h.b16 %v92
  %v629 = vunpack.c.l.b16 %v93
  %v630 = vunpack.c.l.b16 %v94
  %v631 = vunpack.c.h.b16 %v94
  %v632 = vunpack.c.l.b16 %v95
  %v633 = vunpack.c.h.b16 %v95
  %v634 = vunpack.c.l.b16 %v96
  %v635 = vunpack.c.h.b16 %v96
  %v636 = vunpack.c.l.b16 %v97
  %v637 = vunpack.c.h.b16 %v97
  %v638 = vunpack.c.l.b16 %v98
  %v639 = vunpack.c.h.b16 %v98
  %v640 = vunpack.c.l.b16 %v99
  %v641 = vunpack.c.h.b16 %v99
  %v642 = vunpack.c.l.b16 %v100
  %v643 = vunpack.c.l.b16 %v101
  %v644 = vunpack.c.h.b16 %v101
  %v645 = vunpack.c.l.b16 %v102
  %v646 = vunpack.c.h.b16 %v102
  %v647 = vunpack.c.l.b16 %v103
  %v648 = vunpack.c.h.b16 %v103
  %v649 = vunpack.c.l.b16 %v104
  %v650 = vunpack.c.h.b16 %v104
  %v651 = vunpack.c.l.b16 %v105
  %v652 = vunpack.c.h.b16 %v105
  %v653 = vunpack.c.l.b16 %v106
  %v654 = vunpack.c.h.b16 %v106
  %v655 = vunpack.c.l.b16 %v107
  %v656 = vunpack.c.l.b16 %v108
  %v657 = vunpack.c.h.b16 %v108
  %v658 = vunpack.c.l.b16 %v109
  %v659 = vunpack.c.h.b16 %v109
  %v660 = vunpack.c.l.b16 %v110
  %v661 = vunpack.c.h.b16 %v110
  %v662 = vunpack.c.l.b16 %v111
  %v663 = vunpack.c.h.b16 %v111
  %v664 = vunpack.c.l.b16 %v112
  %v665 = vunpack.c.h.b16 %v112
  %v666 = vunpack.c.l.b16 %v113
  %v667 = vunpack.c.h.b16 %v113
  %v668 = vunpack.c.l.b16 %v114
  %v669 = vunpack.c.l.b16 %v115
  %v670 = vunpack.c.h.b16 %v115
  %v671 = vunpack.c.l.b16 %v116
  %v672 = vunpack.c.h.b16 %v116
  %v673 = vunpack.c.l.b16 %v117
  %v674 = vunpack.c.h.b16 %v117
  %v675 = vunpack.c.l.b16 %v118
  %v676 = vunpack.c.h.b16 %v118
  %v677 = vunpack.c.l.b16 %v119
  %v678 = vunpack.c.h.b16 %v119
  %v679 = vunpack.c.l.b16 %v120
  %v680 = vunpack.c.h.b16 %v120
  %v681 = vunpack.c.l.b16 %v121
  %v682 = vunpack.c.l.b16 %v122
  %v683 = vunpack.c.h.b16 %v122
  %v684 = vunpack.c.l.b16 %v123
  %v685 = vunpack.c.h.b16 %v123
  %v686 = vunpack.c.l.b16 %v124
  %v687 = vunpack.c.h.b16 %v124
  %v688 = vunpack.c.l.b16 %v125
  %v689 = vunpack.c.h.b16 %v125
  %v690 = vunpack.c.l.b16 %v126
  %v691 = vunpack.c.h.b16 %v126
  %v692 = vunpack.c.l.b16 %v127
  %v693 = vunpack.c.h.b16 %v127
  %v694 = vunpack.c.l.b16 %v128
  %v695 = vunpack.c.l.b16 %v129
  %v696 = vunpack.c.h.b16 %v129
  %v697 = vunpack.c.l.b16 %v130
  %v698 = vunpack.c.h.b16 %v130
  %v699 = vunpack.c.l.b16 %v131
  %v700 = vunpack.c.h.b16 %v131
  %v701 = vunpack.c.l.b16 %v132
  %v702 = vunpack.c.h.b16 %v132
  %v703 = vunpack.c.l.b16 %v133
  %v704 = vunpack.c.h.b16 %v133
  %v705 = vunpack.c.l.b16 %v134
  %v706 = vunpack.c.h.b16 %v134
  %v707 = vunpack.c.l.b16 %v135
  %v708 = vunpack.c.l.b16 %v136
  %v709 = vunpack.c.h.b16 %v136
  %v710 = vunpack.c.l.b16 %v137
  %v711 = vunpack.c.h.b16 %v137
  %v712 = vunpack.c.l.b16 %v138
  %v713 = vunpack.c.h.b16 %v138
  %v714 = vunpack.c.l.b16 %v139
  %v715 = vunpack.c.h.b16 %v139
  %v716 = vunpack.c.l.b16 %v140
  %v717 = vunpack.c.h.b16 %v140
  %v718 = vunpack.c.l.b16 %v141
  %v719 = vunpack.c.h.b16 %v141
  %v720 = vunpack.c.l.b16 %v142
  %v721 = vunpack.c.l.b16 %v143
  %v722 = vunpack.c.h.b16 %v143
  %v723 = vunpack.c.l.b16 %v144
  %v724 = vunpack.c.h.b16 %v144
  %v725 = vunpack.c.l.b16 %v145
  %v726 = vunpack.c.h.b16 %v145
  %v727 = vunpack.c.l.b16 %v146
  %v728 = vunpack.c.h.b16 %v146
  %v729 = vunpack.c.l.b16 %v147
  %v730 = vunpack.c.h.b16 %v147
  %v731 = vunpack.c.l.b16 %v148
  %v732 = vunpack.c.h.b16 %v148
  %v733 = vunpack.c.l.b16 %v149
  %v734 = vunpack.c.l.b16 %v150
  %v735 = vunpack.c.h.b16 %v150
  %v736 = vunpack.c.l.b16 %v151
  %v737 = vunpack.c.h.b16 %v151
  %v738 = vunpack.c.l.b16 %v152
  %v739 = vunpack.c.h.b16 %v152
  %v740 = vunpack.c.l.b16 %v153
  %v741 = vunpack.c.h.b16 %v153
  %v742 = vunpack.c.l.b16 %v154
  %v743 = vunpack.c.h.b16 %v154
  %v744 = vunpack.c.l.b16 %v155
  %v745 = vunpack.c.h.b16 %v155
  %v746 = vunpack.c.l.b16 %v156
  %v747 = vunpack.c.l.b16 %v157
  %v748 = vunpack.c.h.b16 %v157
  %v749 = vunpack.c.l.b16 %v158
  %v750 = vunpack.c.h.b16 %v158
  %v751 = vunpack.c.l.b16 %v159
  %v752 = vunpack.c.h.b16 %v159
  %v753 = vunpack.c.l.b16 %v160
  %v754 = vunpack.c.h.b16 %v160
  %v755 = vunpack.c.l.b16 %v161
  %v756 = vunpack.c.h.b16 %v161
  %v757 = vunpack.c.l.b16 %v162
  %v758 = vunpack.c.h.b16 %v162
  %v759 = vunpack.c.l.b16 %v163
  %v760 = vunpack.c.l.b16 %v164
  %v761 = vunpack.c.h.b16 %v164
  %v762 = vunpack.c.l.b16 %v165
  %v763 = vunpack.c.h.b16 %v165
  %v764 = vunpack.c.l.b16 %v166
  %v765 = vunpack.c.h.b16 %v166
  %v766 = vunpack.c.l.b16 %v167
  %v767 = vunpack.c.h.b16 %v167
  %v768 = vunpack.c.l.b16 %v168
  %v769 = vunpack.c.h.b16 %v168
  %v770 = vunpack.c.l.b16 %v169
  %v771 = vunpack.c.h.b16 %v169
  %v772 = vunpack.c.l.b16 %v170
  %v773 = vunpack.c.l.b16 %v171
  %v774 = vunpack.c.h.b16 %v171
  %v775 = vunpack.c.l.b16 %v172
  %v776 = vunpack.c.h.b16 %v172
  %v777 = vunpack.c.l.b16 %v173
  %v778 = vunpack.c.h.b16 %v173
  %v779 = vunpack.c.l.b16 %v174
  %v780 = vunpack.c.h.b16 %v174
  %v781 = vunpack.c.l.b16 %v175
  %v782 = vunpack.c.h.b16 %v175
  %v783 = vunpack.c.l.b16 %v176
  %v784 = vunpack.c.h.b16 %v176
  %v785 = vunpack.c.l.b16 %v177
  %v786 = vunpack.c.l.b16 %v178
  %v787 = vunpack.c.h.b16 %v178
  %v788 = vunpack.c.l.b16 %v179
  %v789 = vunpack.c.h.b16 %v179
  %v790 = vunpack.c.l.b16 %v180
  %v791 = vunpack.c.h.b16 %v180
  %v792 = vunpack.c.l.b16 %v181
  %v793 = vunpack.c.h.b16 %v181
  %v794 = vunpack.c.l.b16 %v182
  %v795 = vunpack.c.h.b16 %v182
  %v796 = vunpack.c.l.b16 %v183
  %v797 = vunpack.c.h.b16 %v183
  %v798 = vunpack.c.l.b16 %v184
  %v799 = vunpack.c.l.b16 %v185
  %v800 = vunpack.c.h.b16 %v185
  %v801 = vunpack.c.l.b16 %v186
  %v802 = vunpack.c.h.b16 %v186
  %v803 = vunpack.c.l.b16 %v187
  %v804 = vunpack.c.h.b16 %v187
  %v805 = vunpack.c.l.b16 %v188
  %v806 = vunpack.c.h.b16 %v188
  %v807 = vunpack.c.l.b16 %v189
  %v808 = vunpack.c.h.b16 %v189
  %v809 = vunpack.c.l.b16 %v190
  %v810 = vunpack.c.h.b16 %v190
  %v811 = vunpack.c.l.b16 %v191
  %v812 = vunpack.c.l.b16 %v192
  %v813 = vunpack.c.h.b16 %v192
  %v814 = vunpack.c.l.b16 %v193
  %v815 = vunpack.c.h.b16 %v193
  %v816 = vunpack.c.l.b16 %v194
  %v817 = vunpack.c.h.b16 %v194
  %v818 = vunpack.c.l.b16 %v195
  %v819 = vunpack.c.h.b16 %v195
  %v820 = vunpack.c.l.b16 %v196
  %v821 = vunpack.c.h.b16 %v196
  %v822 = vunpack.c.l.b16 %v197
  %v823 = vunpack.c.h.b16 %v197
  %v824 = vunpack.c.l.b16 %v198
  %v825 = vunpack.c.l.b16 %v199
  %v826 = vunpack.c.h.b16 %v199
  %v827 = vunpack.c.l.b16 %v200
  %v828 = vunpack.c.h.b16 %v200
  %v829 = vunpack.c.l.b16 %v201
  %v830 = vunpack.c.h.b16 %v201
  %v831 = vunpack.c.l.b16 %v202
  %v832 = vunpack.c.h.b16 %v202
  %v833 = vunpack.c.l.b16 %v203
  %v834 = vunpack.c.h.b16 %v203
  %v835 = vunpack.c.l.b16 %v204
  %v836 = vunpack.c.h.b16 %v204
  %v837 = vunpack.c.l.b16 %v205
  %v838 = vunpack.c.l.b16 %v206
  %v839 = vunpack.c.h.b16 %v206
  %v840 = vunpack.c.l.b16 %v207
  %v841 = vunpack.c.h.b16 %v207
  %v842 = vunpack.c.l.b16 %v208
  %v843 = vunpack.c.h.b16 %v208
  %v844 = vunpack.c.l.b16 %v209
  %v845 = vunpack.c.h.b16 %v209
  %v846 = vunpack.c.l.b16 %v210
  %v847 = vunpack.c.h.b16 %v210
  %v848 = vunpack.c.l.b16 %v211
  %v849 = vunpack.c.h.b16 %v211
  %v850 = vunpack.c.l.b16 %v212
  %v851 = vunpack.c.l.b16 %v213
  %v852 = vunpack.c.h.b16 %v213
  %v853 = vunpack.c.l.b16 %v214
  %v854 = vunpack.c.h.b16 %v214
  %v855 = vunpack.c.l.b16 %v215
  %v856 = vunpack.c.h.b16 %v215
  %v857 = vunpack.c.l.b16 %v216
  %v858 = vunpack.c.h.b16 %v216
  %v859 = vunpack.c.l.b16 %v217
  %v860 = vunpack.c.h.b16 %v217
  %v861 = vunpack.c.l.b16 %v218
  %v862 = vunpack.c.h.b16 %v218
  %v863 = vunpack.c.l.b16 %v219
  %v864 = vunpack.c.l.b16 %v220
  %v865 = vunpack.c.h.b16 %v220
  %v866 = vunpack.c.l.b16 %v221
  %v867 = vunpack.c.h.b16 %v221
  %v868 = vunpack.c.l.b16 %v222
  %v869 = vunpack.c.h.b16 %v222
  %v870 = vunpack.c.l.b16 %v223
  %v871 = vunpack.c.h.b16 %v223
  %v872 = vunpack.c.l.b16 %v224
  %v873 = vunpack.c.h.b16 %v224
  %v874 = vunpack.c.l.b16 %v225
  %v875 = vunpack.c.h.b16 %v225
  %v876 = vunpack.c.l.b16 %v226
  %v877 = vunpack.c.l.b16 %v227
  %v878 = vunpack.c.h.b16 %v227
  %v879 = vunpack.c.l.b16 %v228
  %v880 = vunpack.c.h.b16 %v228
  %v881 = vunpack.c.l.b16 %v229
  %v882 = vunpack.c.h.b16 %v229
  %v883 = vunpack.c.l.b16 %v230
  %v884 = vunpack.c.h.b16 %v230
  %v885 = vunpack.c.l.b16 %v231
  %v886 = vunpack.c.h.b16 %v231
  %v887 = vunpack.c.l.b16 %v232
  %v888 = vunpack.c.h.b16 %v232
  %v889 = vunpack.c.l.b16 %v233
  %v890 = vunpack.c.l.b16 %v234
  %v891 = vunpack.c.h.b16 %v234
  %v892 = vunpack.c.l.b16 %v235
  %v893 = vunpack.c.h.b16 %v235
  %v894 = vunpack.c.l.b16 %v236
  %v895 = vunpack.c.h.b16 %v236
  %v896 = vunpack.c.l.b16 %v237
  %v897 = vunpack.c.h.b16 %v237
  %v898 = vunpack.c.l.b16 %v238
  %v899 = vunpack.c.h.b16 %v238
  %v900 = vunpack.c.l.b16 %v239
  %v901 = vunpack.c.h.b16 %v239
  %v902 = vunpack.c.l.b16 %v240
  %v903 = vpack.c.b16 %v500, %v487
  %v904 = vpack.c.b16 %v501, %v488
  %v905 = vpack.c.b16 %v502, %v489
  %v906 = vpack.c.b16 %v503, %v490
  %v907 = vpack.c.b16 %v504, %v491
  %v908 = vpack.c.b16 %v505, %v492
  %v909 = vpack.c.b16 %v506, %v493
  %v910 = vpack.c.b16 %v507, %v494
  %v911 = vpack.c.b16 %v508, %v495
  %v912 = vpack.c.b16 %v509, %v496
  %v913 = vpack.c.b16 %v510, %v497
  %v914 = vpack.c.b16 %v511, %v498
  %v915 = vpack.c.b16 %v512, %v499
  %v916 = vpack.c.b16 %v526, %v513
  %v917 = vpack.c.b16 %v527, %v514
  %v918 = vpack.c.b16 %v528, %v515
  %v919 = vpack.c.b16 %v529, %v516
  %v920 = vpack.c.b16 %v530, %v517
  %v921 = vpack.c.b16 %v531, %v518
  %v922 = vpack.c.b16 %v532, %v519
  %v923 = vpack.c.b16 %v533, %v520
  %v924 = vpack.c.b16 %v534, %v521
  %v925 = vpack.c.b16 %v535, %v522
  %v926 = vpack.c.b16 %v536, %v523
  %v927 = vpack.c.b16 %v537, %v524
  %v928 = vpack.c.b16 %v538, %v525
  %v929 = vpack.c.b16 %v552, %v539
  %v930 = vpack.c.b16 %v553, %v540
  %v931 = vpack.c.b16 %v554, %v541
  %v932 = vpack.c.b16 %v555, %v542
  %v933 = vpack.c.b16 %v556, %v543
  %v934 = vpack.c.b16 %v557, %v544
  %v935 = vpack.c.b16 %v558, %v545
  %v936 = vpack.c.b16 %v559, %v546
  %v937 = vpack.c.b16 %v560, %v547
  %v938 = vpack.c.b16 %v561, %v548
  %v939 = vpack.c.b16 %v562, %v549
  %v940 = vpack.c.b16 %v563, %v550
  %v941 = vpack.c.b16 %v564, %v551
  %v942 = vpack.c.b16 %v578, %v565
  %v943 = vpack.c.b16 %v579, %v566
  %v944 = vpack.c.b16 %v580, %v567
  %v945 = vpack.c.b16 %v581, %v568
  %v946 = vpack.c.b16 %v582, %v569
  %v947 = vpack.c.b16 %v583, %v570
  %v948 = vpack.c.b16 %v584, %v571
  %v949 = vpack.c.b16 %v585, %v572
  %v950 = vpack.c.b16 %v586, %v573
  %v951 = vpack.c.b16 %v587, %v574
  %v952 = vpack.c.b16 %v588, %v575
  %v953 = vpack.c.b16 %v589, %v576
  %v954 = vpack.c.b16 %v590, %v577
  %v955 = vpack.c.b16 %v604, %v591
  %v956 = vpack.c.b16 %v605, %v592
  %v957 = vpack.c.b16 %v606, %v593
  %v958 = vpack.c.b16 %v607, %v594
  %v959 = vpack.c.b16 %v608, %v595
  %v960 = vpack.c.b16 %v609, %v596
  %v961 = vpack.c.b16 %v610, %v597
  %v962 = vpack.c.b16 %v611, %v598
  %v963 = vpack.c.b16 %v612, %v599
  %v964 = vpack.c.b16 %v613, %v600
  %v965 = vpack.c.b16 %v614, %v601
  %v966 = vpack.c.b16 %v615, %v602
  %v967 = vpack.c.b16 %v616, %v603
  %v968 = vpack.c.b16 %v630, %v617
  %v969 = vpack.c.b16 %v631, %v618
  %v970 = vpack.c.b16 %v632, %v619
  %v971 = vpack.c.b16 %v633, %v620
  %v972 = vpack.c.b16 %v634, %v621
  %v973 = vpack.c.b16 %v635, %v622
  %v974 = vpack.c.b16 %v636, %v623
  %v975 = vpack.c.b16 %v637, %v624
  %v976 = vpack.c.b16 %v638, %v625
  %v977 = vpack.c.b16 %v639, %v626
  %v978 = vpack.c.b16 %v640, %v627
  %v979 = vpack.c.b16 %v641, %v628
  %v980 = vpack.c.b16 %v642, %v629
  %v981 = vpack.c.b16 %v656, %v643
  %v982 = vpack.c.b16 %v657, %v644
  %v983 = vpack.c.b16 %v658, %v645
  %v984 = vpack.c.b16 %v659, %v646
  %v985 = vpack.c.b16 %v660, %v647
  %v986 = vpack.c.b16 %v661, %v648
  %v987 = vpack.c.b16 %v662, %v649
  %v988 = vpack.c.b16 %v663, %v650
  %v989 = vpack.c.b16 %v664, %v651
  %v990 = vpack.c.b16 %v665, %v652
  %v991 = vpack.c.b16 %v666, %v653
  %v992 = vpack.c.b16 %v667, %v654
  %v993 = vpack.c.b16 %v668, %v655
  %v994 = vpack.c.b16 %v682, %v669
  %v995 = vpack.c.b16 %v683, %v670
  %v996 = vpack.c.b16 %v684, %v671
  %v997 = vpack.c.b16 %v685, %v672
  %v998 = vpack.c.b16 %v686, %v673
  %v999 = vpack.c.b16 %v687, %v674
  %v1000 = vpack.c.b16 %v688, %v675
  %v1001 = vpack.c.b16 %v689, %v676
  %v1002 = vpack.c.b16 %v690, %v677
  %v1003 = vpack.c.b16 %v691, %v678
  %v1004 = vpack.c.b16 %v692, %v679
  %v1005 = vpack.c.b16 %v693, %v680
  %v1006 = vpack.c.b16 %v694, %v681
  %v1007 = vpack.c.b16 %v708, %v695
  %v1008 = vpack.c.b16 %v709, %v696
  %v1009 = vpack.c.b16 %v710, %v697
  %v1010 = vpack.c.b16 %v711, %v698
  %v1011 = vpack.c.b16 %v712, %v699
  %v1012 = vpack.c.b16 %v713, %v700
  %v1013 = vpack.c.b16 %v714, %v701
  %v1014 = vpack.c.b16 %v715, %v702
  %v1015 = vpack.c.b16 %v716, %v703
  %v1016 = vpack.c.b16 %v717, %v704
  %v1017 = vpack.c.b16 %v718, %v705
  %v1018 = vpack.c.b16 %v719, %v706
  %v1019 = vpack.c.b16 %v720, %v707
  %v1020 = vpack.c.b16 %v734, %v721
  %v1021 = vpack.c.b16 %v735, %v722
  %v1022 = vpack.c.b16 %v736, %v723
  %v1023 = vpack.c.b16 %v737, %v724
  %v1024 = vpack.c.b16 %v738, %v725
  %v1025 = vpack.c.b16 %v739, %v726
  %v1026 = vpack.c.b16 %v740, %v727
  %v1027 = vpack.c.b16 %v741, %v728
  %v1028 = vpack.c.b16 %v742, %v729
  %v1029 = vpack.c.b16 %v743, %v730
  %v1030 = vpack.c.b16 %v744, %v731
  %v1031 = vpack.c.b16 %v745, %v732
  %v1032 = vpack.c.b16 %v746, %v733
  %v1033 = vpack.c.b16 %v760, %v747
  %v1034 = vpack.c.b16 %v761, %v748
  %v1035 = vpack.c.b16 %v762, %v749
  %v1036 = vpack.c.b16 %v763, %v750
  %v1037 = vpack.c.b16 %v764, %v751
  %v1038 = vpack.c.b16 %v765, %v752
  %v1039 = vpack.c.b16 %v766, %v753
  %v1040 = vpack.c.b16 %v767, %v754
  %v1041 = vpack.c.b16 %v768, %v755
  %v1042 = vpack.c.b16 %v769, %v756
  %v1043 = vpack.c.b16 %v770, %v757
  %v1044 = vpack.c.b16 %v771, %v758
  %v1045 = vpack.c.b16 %v772, %v759
  %v1046 = vpack.c.b16 %v786, %v773
  %v1047 = vpack.c.b16 %v787, %v774
  %v1048 = vpack.c.b16 %v788, %v775
  %v1049 = vpack.c.b16 %v789, %v776
  %v1050 = vpack.c.b16 %v790, %v777
  %v1051 = vpack.c.b16 %v791, %v778
  %v1052 = vpack.c.b16 %v792, %v779
  %v1053 = vpack.c.b16 %v793, %v780
  %v1054 = vpack.c.b16 %v794, %v781
  %v1055 = vpack.c.b16 %v795, %v782
  %v1056 = vpack.c.b16 %v796, %v783
  %v1057 = vpack.c.b16 %v797, %v784
  %v1058 = vpack.c.b16 %v798, %v785
  %v1059 = vpack.c.b16 %v812, %v799
  %v1060 = vpack.c.b16 %v813, %v800
  %v1061 = vpack.c.b16 %v814, %v801
  %v1062 = vpack.c.b16 %v815, %v802
  %v1063 = vpack.c.b16 %v816, %v803
  %v1064 = vpack.c.b16 %v817, %v804
  %v1065 = vpack.c.b16 %v818, %v805
  %v1066 = vpack.c.b16 %v819, %v806
  %v1067 = vpack.c.b16 %v820, %v807
  %v1068 = vpack.c.b16 %v821, %v808
  %v1069 = vpack.c.b16 %v822, %v809
  %v1070 = vpack.c.b16 %v823, %v810
  %v1071 = vpack.c.b16 %v824, %v811
  %v1072 = vpack.c.b16 %v838, %v825
  %v1073 = vpack.c.b16 %v839, %v826
  %v1074 = vpack.c.b16 %v840, %v827
  %v1075 = vpack.c.b16 %v841, %v828
  %v1076 = vpack.c.b16 %v842, %v829
  %v1077 = vpack.c.b16 %v843, %v830
  %v1078 = vpack.c.b16 %v844, %v831
  %v1079 = vpack.c.b16 %v845, %v832
  %v1080 = vpack.c.b16 %v846, %v833
  %v1081 = vpack.c.b16 %v847, %v834
  %v1082 = vpack.c.b16 %v848, %v835
  %v1083 = vpack.c.b16 %v849, %v836
  %v1084 = vpack.c.b16 %v850, %v837
  %v1085 = vpack.c.b16 %v864, %v851
  %v1086 = vpack.c.b16 %v865, %v852
  %v1087 = vpack.c.b16 %v866, %v853
  %v1088 = vpack.c.b16 %v867, %v854
  %v1089 = vpack.c.b16 %v868, %v855
  %v1090 = vpack.c.b16 %v869, %v856
  %v1091 = vpack.c.b16 %v870, %v857
  %v1092 = vpack.c.b16 %v871, %v858
  %v1093 = vpack.c.b16 %v872, %v859
  %v1094 = vpack.c.b16 %v873, %v860
  %v1095 = vpack.c.b16 %v874, %v861
  %v1096 = vpack.c.b16 %v875, %v862
  %v1097 = vpack.c.b16 %v876, %v863
  %v1098 = vpack.c.b16 %v890, %v877
  %v1099 = vpack.c.b16 %v891, %v878
  %v1100 = vpack.c.b16 %v892, %v879
  %v1101 = vpack.c.b16 %v893, %v880
  %v1102 = vpack.c.b16 %v894, %v881
  %v1103 = vpack.c.b16 %v895, %v882
  %v1104 = vpack.c.b16 %v896, %v883
  %v1105 = vpack.c.b16 %v897, %v884
  %v1106 = vpack.c.b16 %v898, %v885
  %v1107 = vpack.c.b16 %v899, %v886
  %v1108 = vpack.c.b16 %v900, %v887
  %v1109 = vpack.c.b16 %v901, %v888
  %v1110 = vpack.c.b16 %v902, %v889
  %1319 = vmatprep.subr.bf16.mxu0 %v904
  %1320 = vmatpush1.bf16.msra.mxu0 %v903
  %1321 = vmatprep.subr.bf16.mxu0 %v917
  %1322 = vmatpush1.bf16.msra.mxu0 %v916
  %1323 = vmatprep.subr.bf16.mxu0 %v930
  %1324 = vmatpush1.bf16.msra.mxu0 %v929
  %1325 = vmatprep.subr.bf16.mxu0 %v943
  %1326 = vmatpush1.bf16.msra.mxu0 %v942
  %1327 = vmatprep.subr.bf16.mxu0 %v956
  %1328 = vmatpush1.bf16.msra.mxu0 %v955
  %1329 = vmatprep.subr.bf16.mxu0 %v969
  %1330 = vmatpush1.bf16.msra.mxu0 %v968
  %1331 = vmatprep.subr.bf16.mxu0 %v982
  %1332 = vmatpush1.bf16.msra.mxu0 %v981
  %1333 = vmatprep.subr.bf16.mxu0 %v995
  %1334 = vmatpush1.bf16.msra.mxu0 %v994
  %1335 = vmatprep.subr.bf16.mxu0 %v1008
  %1336 = vmatpush1.bf16.msra.mxu0 %v1007
  %1337 = vmatprep.subr.bf16.mxu0 %v1021
  %1338 = vmatpush1.bf16.msra.mxu0 %v1020
  %1339 = vmatprep.subr.bf16.mxu0 %v1034
  %1340 = vmatpush1.bf16.msra.mxu0 %v1033
  %1341 = vmatprep.subr.bf16.mxu0 %v1047
  %1342 = vmatpush1.bf16.msra.mxu0 %v1046
  %1343 = vmatprep.subr.bf16.mxu0 %v1060
  %1344 = vmatpush1.bf16.msra.mxu0 %v1059
  %1345 = vmatprep.subr.bf16.mxu0 %v1073
  %1346 = vmatpush1.bf16.msra.mxu0 %v1072
  %1347 = vmatprep.subr.bf16.mxu0 %v1086
  %1348 = vmatpush1.bf16.msra.mxu0 %v1085
  %1349 = vmatprep.subr.bf16.mxu0 %v1099
  %1350 = vmatpush1.bf16.msra.mxu0 %v1098
  %1351 = vmatprep.mubr.bf16.mxu0 %v260
  %1352 = vmatmul.mubr.bf16.gmra.mrb[0].mxu0 %v259
  %v1353 = vpop.f32.mrb[0].mxu0
  %v1354 = vadd.f32 %v246, %v1353
  %v1355 = vpop.f32.mrb[0].mxu0
  %v1356 = vadd.f32 %v246, %v1355
  %v1357 = vpop.f32.mrb[0].mxu0
  %v1358 = vadd.f32 %v251, %v1357
  %v1359 = vpop.f32.mrb[0].mxu0
  %v1360 = vadd.f32 %v251, %v1359
  %1361 = vdwg.mxu0
  %1362 = vmatprep.subr.bf16.mxu0 %v906
  %1363 = vmatpush1.bf16.msra.mxu0 %v905
  %1364 = vmatprep.subr.bf16.mxu0 %v919
  %1365 = vmatpush1.bf16.msra.mxu0 %v918
  %1366 = vmatprep.subr.bf16.mxu0 %v932
  %1367 = vmatpush1.bf16.msra.mxu0 %v931
  %1368 = vmatprep.subr.bf16.mxu0 %v945
  %1369 = vmatpush1.bf16.msra.mxu0 %v944
  %1370 = vmatprep.subr.bf16.mxu0 %v958
  %1371 = vmatpush1.bf16.msra.mxu0 %v957
  %1372 = vmatprep.subr.bf16.mxu0 %v971
  %1373 = vmatpush1.bf16.msra.mxu0 %v970
  %1374 = vmatprep.subr.bf16.mxu0 %v984
  %1375 = vmatpush1.bf16.msra.mxu0 %v983
  %1376 = vmatprep.subr.bf16.mxu0 %v997
  %1377 = vmatpush1.bf16.msra.mxu0 %v996
  %1378 = vmatprep.subr.bf16.mxu0 %v1010
  %1379 = vmatpush1.bf16.msra.mxu0 %v1009
  %1380 = vmatprep.subr.bf16.mxu0 %v1023
  %1381 = vmatpush1.bf16.msra.mxu0 %v1022
  %1382 = vmatprep.subr.bf16.mxu0 %v1036
  %1383 = vmatpush1.bf16.msra.mxu0 %v1035
  %1384 = vmatprep.subr.bf16.mxu0 %v1049
  %1385 = vmatpush1.bf16.msra.mxu0 %v1048
  %1386 = vmatprep.subr.bf16.mxu0 %v1062
  %1387 = vmatpush1.bf16.msra.mxu0 %v1061
  %1388 = vmatprep.subr.bf16.mxu0 %v1075
  %1389 = vmatpush1.bf16.msra.mxu0 %v1074
  %1390 = vmatprep.subr.bf16.mxu0 %v1088
  %1391 = vmatpush1.bf16.msra.mxu0 %v1087
  %1392 = vmatprep.subr.bf16.mxu0 %v1101
  %1393 = vmatpush1.bf16.msra.mxu0 %v1100
  %1394 = vmatprep.mubr.bf16.mxu0 %v260
  %1395 = vmatmul.mubr.bf16.gmra.mrb[0].mxu0 %v259
  %v1396 = vpop.f32.mrb[0].mxu0
  %v1397 = vadd.f32 %v246, %v1396
  %v1398 = vpop.f32.mrb[0].mxu0
  %v1399 = vadd.f32 %v246, %v1398
  %v1400 = vpop.f32.mrb[0].mxu0
  %v1401 = vadd.f32 %v251, %v1400
  %v1402 = vpop.f32.mrb[0].mxu0
  %v1403 = vadd.f32 %v251, %v1402
  %1404 = vdwg.mxu0
  %1405 = vmatprep.subr.bf16.mxu0 %v908
  %1406 = vmatpush1.bf16.msra.mxu0 %v907
  %1407 = vmatprep.subr.bf16.mxu0 %v921
  %1408 = vmatpush1.bf16.msra.mxu0 %v920
  %1409 = vmatprep.subr.bf16.mxu0 %v934
  %1410 = vmatpush1.bf16.msra.mxu0 %v933
  %1411 = vmatprep.subr.bf16.mxu0 %v947
  %1412 = vmatpush1.bf16.msra.mxu0 %v946
  %1413 = vmatprep.subr.bf16.mxu0 %v960
  %1414 = vmatpush1.bf16.msra.mxu0 %v959
  %1415 = vmatprep.subr.bf16.mxu0 %v973
  %1416 = vmatpush1.bf16.msra.mxu0 %v972
  %1417 = vmatprep.subr.bf16.mxu0 %v986
  %1418 = vmatpush1.bf16.msra.mxu0 %v985
  %1419 = vmatprep.subr.bf16.mxu0 %v999
  %1420 = vmatpush1.bf16.msra.mxu0 %v998
  %1421 = vmatprep.subr.bf16.mxu0 %v1012
  %1422 = vmatpush1.bf16.msra.mxu0 %v1011
  %1423 = vmatprep.subr.bf16.mxu0 %v1025
  %1424 = vmatpush1.bf16.msra.mxu0 %v1024
  %1425 = vmatprep.subr.bf16.mxu0 %v1038
  %1426 = vmatpush1.bf16.msra.mxu0 %v1037
  %1427 = vmatprep.subr.bf16.mxu0 %v1051
  %1428 = vmatpush1.bf16.msra.mxu0 %v1050
  %1429 = vmatprep.subr.bf16.mxu0 %v1064
  %1430 = vmatpush1.bf16.msra.mxu0 %v1063
  %1431 = vmatprep.subr.bf16.mxu0 %v1077
  %1432 = vmatpush1.bf16.msra.mxu0 %v1076
  %1433 = vmatprep.subr.bf16.mxu0 %v1090
  %1434 = vmatpush1.bf16.msra.mxu0 %v1089
  %1435 = vmatprep.subr.bf16.mxu0 %v1103
  %1436 = vmatpush1.bf16.msra.mxu0 %v1102
  %1437 = vmatprep.mubr.bf16.mxu0 %v260
  %1438 = vmatmul.mubr.bf16.gmra.mrb[0].mxu0 %v259
  %v1439 = vpop.f32.mrb[0].mxu0
  %v1440 = vadd.f32 %v246, %v1439
  %v1441 = vpop.f32.mrb[0].mxu0
  %v1442 = vadd.f32 %v246, %v1441
  %v1443 = vpop.f32.mrb[0].mxu0
  %v1444 = vadd.f32 %v251, %v1443
  %v1445 = vpop.f32.mrb[0].mxu0
  %v1446 = vadd.f32 %v251, %v1445
  %1447 = vdwg.mxu0
  %1448 = vmatprep.subr.bf16.mxu0 %v910
  %1449 = vmatpush1.bf16.msra.mxu0 %v909
  %1450 = vmatprep.subr.bf16.mxu0 %v923
  %1451 = vmatpush1.bf16.msra.mxu0 %v922
  %1452 = vmatprep.subr.bf16.mxu0 %v936
  %1453 = vmatpush1.bf16.msra.mxu0 %v935
  %1454 = vmatprep.subr.bf16.mxu0 %v949
  %1455 = vmatpush1.bf16.msra.mxu0 %v948
  %1456 = vmatprep.subr.bf16.mxu0 %v962
  %1457 = vmatpush1.bf16.msra.mxu0 %v961
  %1458 = vmatprep.subr.bf16.mxu0 %v975
  %1459 = vmatpush1.bf16.msra.mxu0 %v974
  %1460 = vmatprep.subr.bf16.mxu0 %v988
  %1461 = vmatpush1.bf16.msra.mxu0 %v987
  %1462 = vmatprep.subr.bf16.mxu0 %v1001
  %1463 = vmatpush1.bf16.msra.mxu0 %v1000
  %1464 = vmatprep.subr.bf16.mxu0 %v1014
  %1465 = vmatpush1.bf16.msra.mxu0 %v1013
  %1466 = vmatprep.subr.bf16.mxu0 %v1027
  %1467 = vmatpush1.bf16.msra.mxu0 %v1026
  %1468 = vmatprep.subr.bf16.mxu0 %v1040
  %1469 = vmatpush1.bf16.msra.mxu0 %v1039
  %1470 = vmatprep.subr.bf16.mxu0 %v1053
  %1471 = vmatpush1.bf16.msra.mxu0 %v1052
  %1472 = vmatprep.subr.bf16.mxu0 %v1066
  %1473 = vmatpush1.bf16.msra.mxu0 %v1065
  %1474 = vmatprep.subr.bf16.mxu0 %v1079
  %1475 = vmatpush1.bf16.msra.mxu0 %v1078
  %1476 = vmatprep.subr.bf16.mxu0 %v1092
  %1477 = vmatpush1.bf16.msra.mxu0 %v1091
  %1478 = vmatprep.subr.bf16.mxu0 %v1105
  %1479 = vmatpush1.bf16.msra.mxu0 %v1104
  %1480 = vmatprep.mubr.bf16.mxu0 %v260
  %1481 = vmatmul.mubr.bf16.gmra.mrb[0].mxu0 %v259
  %v1482 = vpop.f32.mrb[0].mxu0
  %v1483 = vadd.f32 %v246, %v1482
  %v1484 = vpop.f32.mrb[0].mxu0
  %v1485 = vadd.f32 %v246, %v1484
  %v1486 = vpop.f32.mrb[0].mxu0
  %v1487 = vadd.f32 %v251, %v1486
  %v1488 = vpop.f32.mrb[0].mxu0
  %v1489 = vadd.f32 %v251, %v1488
  %1490 = vdwg.mxu0
  %1491 = vmatprep.subr.bf16.mxu0 %v912
  %1492 = vmatpush1.bf16.msra.mxu0 %v911
  %1493 = vmatprep.subr.bf16.mxu0 %v925
  %1494 = vmatpush1.bf16.msra.mxu0 %v924
  %1495 = vmatprep.subr.bf16.mxu0 %v938
  %1496 = vmatpush1.bf16.msra.mxu0 %v937
  %1497 = vmatprep.subr.bf16.mxu0 %v951
  %1498 = vmatpush1.bf16.msra.mxu0 %v950
  %1499 = vmatprep.subr.bf16.mxu0 %v964
  %1500 = vmatpush1.bf16.msra.mxu0 %v963
  %1501 = vmatprep.subr.bf16.mxu0 %v977
  %1502 = vmatpush1.bf16.msra.mxu0 %v976
  %1503 = vmatprep.subr.bf16.mxu0 %v990
  %1504 = vmatpush1.bf16.msra.mxu0 %v989
  %1505 = vmatprep.subr.bf16.mxu0 %v1003
  %1506 = vmatpush1.bf16.msra.mxu0 %v1002
  %1507 = vmatprep.subr.bf16.mxu0 %v1016
  %1508 = vmatpush1.bf16.msra.mxu0 %v1015
  %1509 = vmatprep.subr.bf16.mxu0 %v1029
  %1510 = vmatpush1.bf16.msra.mxu0 %v1028
  %1511 = vmatprep.subr.bf16.mxu0 %v1042
  %1512 = vmatpush1.bf16.msra.mxu0 %v1041
  %1513 = vmatprep.subr.bf16.mxu0 %v1055
  %1514 = vmatpush1.bf16.msra.mxu0 %v1054
  %1515 = vmatprep.subr.bf16.mxu0 %v1068
  %1516 = vmatpush1.bf16.msra.mxu0 %v1067
  %1517 = vmatprep.subr.bf16.mxu0 %v1081
  %1518 = vmatpush1.bf16.msra.mxu0 %v1080
  %1519 = vmatprep.subr.bf16.mxu0 %v1094
  %1520 = vmatpush1.bf16.msra.mxu0 %v1093
  %1521 = vmatprep.subr.bf16.mxu0 %v1107
  %1522 = vmatpush1.bf16.msra.mxu0 %v1106
  %1523 = vmatprep.mubr.bf16.mxu0 %v260
  %1524 = vmatmul.mubr.bf16.gmra.mrb[0].mxu0 %v259
  %v1525 = vpop.f32.mrb[0].mxu0
  %v1526 = vadd.f32 %v246, %v1525
  %v1527 = vpop.f32.mrb[0].mxu0
  %v1528 = vadd.f32 %v246, %v1527
  %v1529 = vpop.f32.mrb[0].mxu0
  %v1530 = vadd.f32 %v251, %v1529
  %v1531 = vpop.f32.mrb[0].mxu0
  %v1532 = vadd.f32 %v251, %v1531
  %1533 = vdwg.mxu0
  %1534 = vmatprep.subr.bf16.mxu0 %v914
  %1535 = vmatpush1.bf16.msra.mxu0 %v913
  %1536 = vmatprep.subr.bf16.mxu0 %v927
  %1537 = vmatpush1.bf16.msra.mxu0 %v926
  %1538 = vmatprep.subr.bf16.mxu0 %v940
  %1539 = vmatpush1.bf16.msra.mxu0 %v939
  %1540 = vmatprep.subr.bf16.mxu0 %v953
  %1541 = vmatpush1.bf16.msra.mxu0 %v952
  %1542 = vmatprep.subr.bf16.mxu0 %v966
  %1543 = vmatpush1.bf16.msra.mxu0 %v965
  %1544 = vmatprep.subr.bf16.mxu0 %v979
  %1545 = vmatpush1.bf16.msra.mxu0 %v978
  %1546 = vmatprep.subr.bf16.mxu0 %v992
  %1547 = vmatpush1.bf16.msra.mxu0 %v991
  %1548 = vmatprep.subr.bf16.mxu0 %v1005
  %1549 = vmatpush1.bf16.msra.mxu0 %v1004
  %1550 = vmatprep.subr.bf16.mxu0 %v1018
  %1551 = vmatpush1.bf16.msra.mxu0 %v1017
  %1552 = vmatprep.subr.bf16.mxu0 %v1031
  %1553 = vmatpush1.bf16.msra.mxu0 %v1030
  %1554 = vmatprep.subr.bf16.mxu0 %v1044
  %1555 = vmatpush1.bf16.msra.mxu0 %v1043
  %1556 = vmatprep.subr.bf16.mxu0 %v1057
  %1557 = vmatpush1.bf16.msra.mxu0 %v1056
  %1558 = vmatprep.subr.bf16.mxu0 %v1070
  %1559 = vmatpush1.bf16.msra.mxu0 %v1069
  %1560 = vmatprep.subr.bf16.mxu0 %v1083
  %1561 = vmatpush1.bf16.msra.mxu0 %v1082
  %1562 = vmatprep.subr.bf16.mxu0 %v1096
  %1563 = vmatpush1.bf16.msra.mxu0 %v1095
  %1564 = vmatprep.subr.bf16.mxu0 %v1109
  %1565 = vmatpush1.bf16.msra.mxu0 %v1108
  %1566 = vmatprep.mubr.bf16.mxu0 %v260
  %1567 = vmatmul.mubr.bf16.gmra.mrb[0].mxu0 %v259
  %v1568 = vpop.f32.mrb[0].mxu0
  %v1569 = vadd.f32 %v246, %v1568
  %v1570 = vpop.f32.mrb[0].mxu0
  %v1571 = vadd.f32 %v246, %v1570
  %v1572 = vpop.f32.mrb[0].mxu0
  %v1573 = vadd.f32 %v251, %v1572
  %v1574 = vpop.f32.mrb[0].mxu0
  %v1575 = vadd.f32 %v251, %v1574
  %1576 = vdwg.mxu0
  %1577 = vmatprep.subr.bf16.mxu0 0
  %1578 = vmatpush1.bf16.msra.mxu0 %v915
  %1579 = vmatprep.subr.bf16.mxu0 0
  %1580 = vmatpush1.bf16.msra.mxu0 %v928
  %1581 = vmatprep.subr.bf16.mxu0 0
  %1582 = vmatpush1.bf16.msra.mxu0 %v941
  %1583 = vmatprep.subr.bf16.mxu0 0
  %1584 = vmatpush1.bf16.msra.mxu0 %v954
  %1585 = vmatprep.subr.bf16.mxu0 0
  %1586 = vmatpush1.bf16.msra.mxu0 %v967
  %1587 = vmatprep.subr.bf16.mxu0 0
  %1588 = vmatpush1.bf16.msra.mxu0 %v980
  %1589 = vmatprep.subr.bf16.mxu0 0
  %1590 = vmatpush1.bf16.msra.mxu0 %v993
  %1591 = vmatprep.subr.bf16.mxu0 0
  %1592 = vmatpush1.bf16.msra.mxu0 %v1006
  %1593 = vmatprep.subr.bf16.mxu0 0
  %1594 = vmatpush1.bf16.msra.mxu0 %v1019
  %1595 = vmatprep.subr.bf16.mxu0 0
  %1596 = vmatpush1.bf16.msra.mxu0 %v1032
  %1597 = vmatprep.subr.bf16.mxu0 0
  %1598 = vmatpush1.bf16.msra.mxu0 %v1045
  %1599 = vmatprep.subr.bf16.mxu0 0
  %1600 = vmatpush1.bf16.msra.mxu0 %v1058
  %1601 = vmatprep.subr.bf16.mxu0 0
  %1602 = vmatpush1.bf16.msra.mxu0 %v1071
  %1603 = vmatprep.subr.bf16.mxu0 0
  %1604 = vmatpush1.bf16.msra.mxu0 %v1084
  %1605 = vmatprep.subr.bf16.mxu0 0
  %1606 = vmatpush1.bf16.msra.mxu0 %v1097
  %1607 = vmatprep.subr.bf16.mxu0 0
  %1608 = vmatpush1.bf16.msra.mxu0 %v1110
  %1609 = vmatprep.mubr.bf16.mxu0 %v260
  %1610 = vmatmul.mubr.bf16.gmra.mrb[0].mxu0 %v259
  %v1611 = vpop.f32.mrb[0].mxu0
  %v1612 = vadd.f32 %v246, %v1611
  %v1613 = vpop.f32.mrb[0].mxu0
  %v1614 = vpop.f32.mrb[0].mxu0
  %v1615 = vadd.f32 %v251, %v1614
  %v1616 = vpop.f32.mrb[0].mxu0
  %1617 = vdwg.mxu0
  %v1618 = vmax.f32 %v1354, 0.0
  %v1619 = vmax.f32 %v1356, 0.0
  %v1620 = vmax.f32 %v1397, 0.0
  %v1621 = vmax.f32 %v1399, 0.0
  %v1622 = vmax.f32 %v1440, 0.0
  %v1623 = vmax.f32 %v1442, 0.0
  %v1624 = vmax.f32 %v1483, 0.0
  %v1625 = vmax.f32 %v1485, 0.0
  %v1626 = vmax.f32 %v1526, 0.0
  %v1627 = vmax.f32 %v1528, 0.0
  %v1628 = vmax.f32 %v1569, 0.0
  %v1629 = vmax.f32 %v1571, 0.0
  %v1630 = vmax.f32 %v1612, 0.0
  %v1631 = vmax.f32 %v1358, 0.0
  %v1632 = vmax.f32 %v1360, 0.0
  %v1633 = vmax.f32 %v1401, 0.0
  %v1634 = vmax.f32 %v1403, 0.0
  %v1635 = vmax.f32 %v1444, 0.0
  %v1636 = vmax.f32 %v1446, 0.0
  %v1637 = vmax.f32 %v1487, 0.0
  %v1638 = vmax.f32 %v1489, 0.0
  %v1639 = vmax.f32 %v1530, 0.0
  %v1640 = vmax.f32 %v1532, 0.0
  %v1641 = vmax.f32 %v1573, 0.0
  %v1642 = vmax.f32 %v1575, 0.0
  %v1643 = vmax.f32 %v1615, 0.0
  %v1644 = vpack.c.bf16 %v1631, %v1618
  %v1645 = vpack.c.bf16 %v1632, %v1619
  %v1646 = vpack.c.bf16 %v1633, %v1620
  %v1647 = vpack.c.bf16 %v1634, %v1621
  %v1648 = vpack.c.bf16 %v1635, %v1622
  %v1649 = vpack.c.bf16 %v1636, %v1623
  %v1650 = vpack.c.bf16 %v1637, %v1624
  %v1651 = vpack.c.bf16 %v1638, %v1625
  %v1652 = vpack.c.bf16 %v1639, %v1626
  %v1653 = vpack.c.bf16 %v1640, %v1627
  %v1654 = vpack.c.bf16 %v1641, %v1628
  %v1655 = vpack.c.bf16 %v1642, %v1629
  %v1656 = vpack.c.bf16 %v1643, %v1630
  %v1670 = vunpack.c.l.b16 %v1644
  %v1671 = vunpack.c.l.b16 %v1645
  %v1672 = vunpack.c.l.b16 %v1646
  %v1673 = vunpack.c.l.b16 %v1647
  %v1674 = vunpack.c.l.b16 %v1648
  %v1675 = vunpack.c.l.b16 %v1649
  %v1676 = vunpack.c.l.b16 %v1650
  %v1677 = vunpack.c.l.b16 %v1651
  %v1678 = vunpack.c.l.b16 %v1652
  %v1679 = vunpack.c.l.b16 %v1653
  %v1680 = vunpack.c.l.b16 %v1654
  %v1681 = vunpack.c.l.b16 %v1655
  %v1682 = vunpack.c.l.b16 %v1656
  %v1683 = vunpack.c.h.b16 %v1644
  %v1684 = vunpack.c.h.b16 %v1645
  %v1685 = vunpack.c.h.b16 %v1646
  %v1686 = vunpack.c.h.b16 %v1647
  %v1687 = vunpack.c.h.b16 %v1648
  %v1688 = vunpack.c.h.b16 %v1649
  %v1689 = vunpack.c.h.b16 %v1650
  %v1690 = vunpack.c.h.b16 %v1651
  %v1691 = vunpack.c.h.b16 %v1652
  %v1692 = vunpack.c.h.b16 %v1653
  %v1693 = vunpack.c.h.b16 %v1654
  %v1694 = vunpack.c.h.b16 %v1655
  %v1695 = vunpack.c.h.b16 %v1656
  %v1696 = vpack.c.b16 %v1671, %v1670
  %v1697 = vpack.c.b16 %v1673, %v1672
  %v1698 = vpack.c.b16 %v1675, %v1674
  %v1699 = vpack.c.b16 %v1677, %v1676
  %v1700 = vpack.c.b16 %v1679, %v1678
  %v1701 = vpack.c.b16 %v1681, %v1680
  %v1702 = vpack.c.b16 %v1682, %v1682
  %v1703 = vpack.c.b16 %v1684, %v1683
  %v1704 = vpack.c.b16 %v1686, %v1685
  %v1705 = vpack.c.b16 %v1688, %v1687
  %v1706 = vpack.c.b16 %v1690, %v1689
  %v1707 = vpack.c.b16 %v1692, %v1691
  %v1708 = vpack.c.b16 %v1694, %v1693
  %v1709 = vpack.c.b16 %v1695, %v1695
  %1724 = vst [vmem:[%s3] sm:$0xff] %v1696
  %1725 = vst [vmem:[%s3 + $0x8] sm:$0xff] %v1697
  %1726 = vst [vmem:[%s3 + $0x10] sm:$0xff] %v1698
  %1727 = vst [vmem:[%s3 + $0x18] sm:$0xff] %v1699
  %1728 = vst [vmem:[%s3 + $0x20] sm:$0xff] %v1700
  %1729 = vst [vmem:[%s3 + $0x28] sm:$0xff] %v1701
  %1730 = vst [vmem:[%s3 + $0x30] sm:$0xf] %v1702
  %vm1731 = vcmask 1040384
  %vm1732 = vsmask.f32 256
  %vm1733 = vmand %vm1731, %vm1732
  %vm1734 = vcmask 1044484
  %vm1735 = vsmask.f32 4352
  %vm1736 = vmand %vm1734, %vm1735
  %vm1737 = vmor %vm1736, %vm1733
  %v1738 = vld [vmem:[%s3 + $0x34] sm:$0x11]
  %v1739 = vsel %vm1737, %v1703, %v1738
  %1740 = vst [vmem:[%s3 + $0x34] sm:$0x11] %v1739
  %v1741 = vld [vmem:[%s3 + $0x3c] sm:$0x11]
  %v1742 = vsel %vm1737, %v1704, %v1741
  %1743 = vst [vmem:[%s3 + $0x3c] sm:$0x11] %v1742
  %v1744 = vld [vmem:[%s3 + $0x44] sm:$0x11]
  %v1745 = vsel %vm1737, %v1705, %v1744
  %1746 = vst [vmem:[%s3 + $0x44] sm:$0x11] %v1745
  %v1747 = vld [vmem:[%s3 + $0x4c] sm:$0x11]
  %v1748 = vsel %vm1737, %v1706, %v1747
  %1749 = vst [vmem:[%s3 + $0x4c] sm:$0x11] %v1748
  %v1750 = vld [vmem:[%s3 + $0x54] sm:$0x11]
  %v1751 = vsel %vm1737, %v1707, %v1750
  %1752 = vst [vmem:[%s3 + $0x54] sm:$0x11] %v1751
  %v1753 = vld [vmem:[%s3 + $0x5c] sm:$0x11]
  %v1754 = vsel %vm1737, %v1708, %v1753
  %1755 = vst [vmem:[%s3 + $0x5c] sm:$0x11] %v1754
  %v1756 = vld [vmem:[%s3 + $0x64] sm:$0x1]
  %v1757 = vsel %vm1733, %v1709, %v1756
  %1758 = vst [vmem:[%s3 + $0x64] sm:$0x1] %v1757
  // Predicated region
  $region14: #{student_net2_forward.2} parent=0 // pred_check
    _
  $region15: #{student_net2_forward.2} parent=0 // pred_check_branch
    %1760 = sbr.rel (0) target = $region17
  $region16: #{student_net2_forward.2} parent=0 // pred_region
    _
  $region17: #{student_net2_forward.2} parent=0 // pred_fallthru
    _
  // Predicated region
  $region18: #{student_net2_forward.2} parent=0 // pred_check
    _
  $region19: #{student_net2_forward.2} parent=0 // pred_check_branch
    %1762 = sbr.rel (0) target = $region21
  $region20: #{student_net2_forward.2} parent=0 // pred_region
    _
  $region21: #{student_net2_forward.2} parent=0 // pred_fallthru
    _

// kernel: student_net2_forward.3
$region0: #{student_net2_forward.3}
  #allocation0 [shape = 'u32[]', space=smem, size = 0x4, offset = 0x4, fixed_abs, tag = 'smem constant byte address 0x4 - core index']
  #allocation1 [shape = 'u32[144,128]{1,0:T(1,128)}', space=vmem, size = 0x12000, scoped, tag = 'internal scratch']
  %s0 = inlined_call_operand.vmem [shape: bf16[9,768], index: 0, kind: input, shape index: {}]
  %s1 = inlined_call_operand.vmem [shape: bf16[768,256], index: 1, kind: input, shape index: {}]
  %s2 = inlined_call_operand.vmem [shape: f32[9,1], index: 2, kind: input, shape index: {}]
  %s3 = inlined_call_operand.vmem [shape: bf16[9,256], index: 3, kind: output, shape index: {}]
  %s4 = sld [smem:[#allocation0]]
  $region22: #{student_net2_forward.3} parent=0
    _
  %s6 = ssub.s32 1, %s4
  %s7 = scalar_select 0, %s6, %s4
  // Predicated region
  $region2: #{student_net2_forward.3} parent=0 // pred_check
    _
  $region3: #{student_net2_forward.3} parent=0 // pred_check_branch
    %9 = sbr.rel (0) target = $region5
  $region4: #{student_net2_forward.3} parent=0 // pred_region
    _
  $region5: #{student_net2_forward.3} parent=0 // pred_fallthru
    _
  // Predicated region
  $region6: #{student_net2_forward.3} parent=0 // pred_check
    _
  $region7: #{student_net2_forward.3} parent=0 // pred_check_branch
    %11 = sbr.rel (0) target = $region9
  $region8: #{student_net2_forward.3} parent=0 // pred_region
    _
  $region9: #{student_net2_forward.3} parent=0 // pred_fallthru
    _
  // Predicated region
  $region10: #{student_net2_forward.3} parent=0 // pred_check
    _
  $region11: #{student_net2_forward.3} parent=0 // pred_check_branch
    %13 = sbr.rel (0) target = $region13
  $region12: #{student_net2_forward.3} parent=0 // pred_region
    _
  $region13: #{student_net2_forward.3} parent=0 // pred_fallthru
    _
  %v14 = vld [vmem:[%s0] sm:$0xff]
  %v15 = vld [vmem:[%s0 + $0x8] sm:$0xff]
  %v16 = vld [vmem:[%s0 + $0x10] sm:$0xff]
  %v17 = vld [vmem:[%s0 + $0x18] sm:$0x11]
  %v18 = vld [vmem:[%s0 + $0x20] sm:$0x11]
  %v19 = vld [vmem:[%s0 + $0x28] sm:$0x11]
  %v20 = vld [vmem:[%s1] sm:$0xff]
  %v21 = vld [vmem:[%s1 + $0x8] sm:$0xff]
  %v22 = vld [vmem:[%s1 + $0x10] sm:$0xff]
  %v23 = vld [vmem:[%s1 + $0x18] sm:$0xff]
  %v24 = vld [vmem:[%s1 + $0x20] sm:$0xff]
  %v25 = vld [vmem:[%s1 + $0x28] sm:$0xff]
  %v26 = vld [vmem:[%s1 + $0x30] sm:$0xff]
  %v27 = vld [vmem:[%s1 + $0x38] sm:$0xff]
  %v28 = vld [vmem:[%s1 + $0x40] sm:$0xff]
  %v29 = vld [vmem:[%s1 + $0x48] sm:$0xff]
  %v30 = vld [vmem:[%s1 + $0x50] sm:$0xff]
  %v31 = vld [vmem:[%s1 + $0x58] sm:$0xff]
  %v32 = vld [vmem:[%s1 + $0x60] sm:$0xff]
  %v33 = vld [vmem:[%s1 + $0x68] sm:$0xff]
  %v34 = vld [vmem:[%s1 + $0x70] sm:$0xff]
  %v35 = vld [vmem:[%s1 + $0x78] sm:$0xff]
  %v36 = vld [vmem:[%s1 + $0x80] sm:$0xff]
  %v37 = vld [vmem:[%s1 + $0x88] sm:$0xff]
  %v38 = vld [vmem:[%s1 + $0x90] sm:$0xff]
  %v39 = vld [vmem:[%s1 + $0x98] sm:$0xff]
  %v40 = vld [vmem:[%s1 + $0xa0] sm:$0xff]
  %v41 = vld [vmem:[%s1 + $0xa8] sm:$0xff]
  %v42 = vld [vmem:[%s1 + $0xb0] sm:$0xff]
  %v43 = vld [vmem:[%s1 + $0xb8] sm:$0xff]
  %v44 = vld [vmem:[%s1 + $0xc0] sm:$0xff]
  %v45 = vld [vmem:[%s1 + $0xc8] sm:$0xff]
  %v46 = vld [vmem:[%s1 + $0xd0] sm:$0xff]
  %v47 = vld [vmem:[%s1 + $0xd8] sm:$0xff]
  %v48 = vld [vmem:[%s1 + $0xe0] sm:$0xff]
  %v49 = vld [vmem:[%s1 + $0xe8] sm:$0xff]
  %v50 = vld [vmem:[%s1 + $0xf0] sm:$0xff]
  %v51 = vld [vmem:[%s1 + $0xf8] sm:$0xff]
  %v52 = vld [vmem:[%s1 + $0x100] sm:$0xff]
  %v53 = vld [vmem:[%s1 + $0x108] sm:$0xff]
  %v54 = vld [vmem:[%s1 + $0x110] sm:$0xff]
  %v55 = vld [vmem:[%s1 + $0x118] sm:$0xff]
  %v56 = vld [vmem:[%s1 + $0x120] sm:$0xff]
  %v57 = vld [vmem:[%s1 + $0x128] sm:$0xff]
  %v58 = vld [vmem:[%s1 + $0x130] sm:$0xff]
  %v59 = vld [vmem:[%s1 + $0x138] sm:$0xff]
  %v60 = vld [vmem:[%s1 + $0x140] sm:$0xff]
  %v61 = vld [vmem:[%s1 + $0x148] sm:$0xff]
  %v62 = vld [vmem:[%s1 + $0x150] sm:$0xff]
  %v63 = vld [vmem:[%s1 + $0x158] sm:$0xff]
  %v64 = vld [vmem:[%s1 + $0x160] sm:$0xff]
  %v65 = vld [vmem:[%s1 + $0x168] sm:$0xff]
  %v66 = vld [vmem:[%s1 + $0x170] sm:$0xff]
  %v67 = vld [vmem:[%s1 + $0x178] sm:$0xff]
  %v68 = vld [vmem:[%s1 + $0x180] sm:$0xff]
  %v69 = vld [vmem:[%s1 + $0x188] sm:$0xff]
  %v70 = vld [vmem:[%s1 + $0x190] sm:$0xff]
  %v71 = vld [vmem:[%s1 + $0x198] sm:$0xff]
  %v72 = vld [vmem:[%s1 + $0x1a0] sm:$0xff]
  %v73 = vld [vmem:[%s1 + $0x1a8] sm:$0xff]
  %v74 = vld [vmem:[%s1 + $0x1b0] sm:$0xff]
  %v75 = vld [vmem:[%s1 + $0x1b8] sm:$0xff]
  %v76 = vld [vmem:[%s1 + $0x1c0] sm:$0xff]
  %v77 = vld [vmem:[%s1 + $0x1c8] sm:$0xff]
  %v78 = vld [vmem:[%s1 + $0x1d0] sm:$0xff]
  %v79 = vld [vmem:[%s1 + $0x1d8] sm:$0xff]
  %v80 = vld [vmem:[%s1 + $0x1e0] sm:$0xff]
  %v81 = vld [vmem:[%s1 + $0x1e8] sm:$0xff]
  %v82 = vld [vmem:[%s1 + $0x1f0] sm:$0xff]
  %v83 = vld [vmem:[%s1 + $0x1f8] sm:$0xff]
  %v84 = vld [vmem:[%s1 + $0x200] sm:$0xff]
  %v85 = vld [vmem:[%s1 + $0x208] sm:$0xff]
  %v86 = vld [vmem:[%s1 + $0x210] sm:$0xff]
  %v87 = vld [vmem:[%s1 + $0x218] sm:$0xff]
  %v88 = vld [vmem:[%s1 + $0x220] sm:$0xff]
  %v89 = vld [vmem:[%s1 + $0x228] sm:$0xff]
  %v90 = vld [vmem:[%s1 + $0x230] sm:$0xff]
  %v91 = vld [vmem:[%s1 + $0x238] sm:$0xff]
  %v92 = vld [vmem:[%s1 + $0x240] sm:$0xff]
  %v93 = vld [vmem:[%s1 + $0x248] sm:$0xff]
  %v94 = vld [vmem:[%s1 + $0x250] sm:$0xff]
  %v95 = vld [vmem:[%s1 + $0x258] sm:$0xff]
  %v96 = vld [vmem:[%s1 + $0x260] sm:$0xff]
  %v97 = vld [vmem:[%s1 + $0x268] sm:$0xff]
  %v98 = vld [vmem:[%s1 + $0x270] sm:$0xff]
  %v99 = vld [vmem:[%s1 + $0x278] sm:$0xff]
  %v100 = vld [vmem:[%s1 + $0x280] sm:$0xff]
  %v101 = vld [vmem:[%s1 + $0x288] sm:$0xff]
  %v102 = vld [vmem:[%s1 + $0x290] sm:$0xff]
  %v103 = vld [vmem:[%s1 + $0x298] sm:$0xff]
  %v104 = vld [vmem:[%s1 + $0x2a0] sm:$0xff]
  %v105 = vld [vmem:[%s1 + $0x2a8] sm:$0xff]
  %v106 = vld [vmem:[%s1 + $0x2b0] sm:$0xff]
  %v107 = vld [vmem:[%s1 + $0x2b8] sm:$0xff]
  %v108 = vld [vmem:[%s1 + $0x2c0] sm:$0xff]
  %v109 = vld [vmem:[%s1 + $0x2c8] sm:$0xff]
  %v110 = vld [vmem:[%s1 + $0x2d0] sm:$0xff]
  %v111 = vld [vmem:[%s1 + $0x2d8] sm:$0xff]
  %v112 = vld [vmem:[%s1 + $0x2e0] sm:$0xff]
  %v113 = vld [vmem:[%s1 + $0x2e8] sm:$0xff]
  %v114 = vld [vmem:[%s1 + $0x2f0] sm:$0xff]
  %v115 = vld [vmem:[%s1 + $0x2f8] sm:$0xff]
  %v116 = vld [vmem:[%s2] sm:$0xff]
  %v117 = vld [vmem:[%s2 + $0x8] sm:$0x1]
  %119 = vset.pattern.permute.xlu0 0
  %120 = vperm.xlu0 %119, %v116
  %v121 = vpop.permute.xlu0 %120
  %124 = vset.pattern.permute.xlu0 0
  %125 = vperm.xlu0 %124, %v117
  %v126 = vpop.permute.xlu0 %125
  %v134 = vunpack.c.l.b16 %v14
  %v135 = vunpack.c.h.b16 %v14
  %v136 = vunpack.c.l.b16 %v15
  %v137 = vunpack.c.h.b16 %v15
  %v138 = vunpack.c.l.b16 %v16
  %v139 = vunpack.c.h.b16 %v16
  %v140 = vunpack.c.l.b16 %v17
  %v141 = vunpack.c.h.b16 %v17
  %v142 = vunpack.c.l.b16 %v18
  %v143 = vunpack.c.h.b16 %v18
  %v144 = vunpack.c.l.b16 %v19
  %v145 = vunpack.c.h.b16 %v19
  %v146 = vpack.c.b16 %v140, %v134
  %v147 = vpack.c.b16 %v141, %v135
  %v148 = vpack.c.b16 %v142, %v136
  %v149 = vpack.c.b16 %v143, %v137
  %v150 = vpack.c.b16 %v144, %v138
  %v151 = vpack.c.b16 %v145, %v139
  %v254 = vunpack.c.l.b16 %v20
  %v255 = vunpack.c.h.b16 %v20
  %v256 = vunpack.c.l.b16 %v21
  %v257 = vunpack.c.h.b16 %v21
  %v258 = vunpack.c.l.b16 %v22
  %v259 = vunpack.c.h.b16 %v22
  %v260 = vunpack.c.l.b16 %v23
  %v261 = vunpack.c.h.b16 %v23
  %v262 = vunpack.c.l.b16 %v24
  %v263 = vunpack.c.h.b16 %v24
  %v264 = vunpack.c.l.b16 %v25
  %v265 = vunpack.c.h.b16 %v25
  %v266 = vunpack.c.l.b16 %v26
  %v267 = vunpack.c.h.b16 %v26
  %v268 = vunpack.c.l.b16 %v27
  %v269 = vunpack.c.h.b16 %v27
  %v270 = vunpack.c.l.b16 %v28
  %v271 = vunpack.c.h.b16 %v28
  %v272 = vunpack.c.l.b16 %v29
  %v273 = vunpack.c.h.b16 %v29
  %v274 = vunpack.c.l.b16 %v30
  %v275 = vunpack.c.h.b16 %v30
  %v276 = vunpack.c.l.b16 %v31
  %v277 = vunpack.c.h.b16 %v31
  %v278 = vunpack.c.l.b16 %v32
  %v279 = vunpack.c.h.b16 %v32
  %v280 = vunpack.c.l.b16 %v33
  %v281 = vunpack.c.h.b16 %v33
  %v282 = vunpack.c.l.b16 %v34
  %v283 = vunpack.c.h.b16 %v34
  %v284 = vunpack.c.l.b16 %v35
  %v285 = vunpack.c.h.b16 %v35
  %v286 = vunpack.c.l.b16 %v36
  %v287 = vunpack.c.h.b16 %v36
  %v288 = vunpack.c.l.b16 %v37
  %v289 = vunpack.c.h.b16 %v37
  %v290 = vunpack.c.l.b16 %v38
  %v291 = vunpack.c.h.b16 %v38
  %v292 = vunpack.c.l.b16 %v39
  %v293 = vunpack.c.h.b16 %v39
  %v294 = vunpack.c.l.b16 %v40
  %v295 = vunpack.c.h.b16 %v40
  %v296 = vunpack.c.l.b16 %v41
  %v297 = vunpack.c.h.b16 %v41
  %v298 = vunpack.c.l.b16 %v42
  %v299 = vunpack.c.h.b16 %v42
  %v300 = vunpack.c.l.b16 %v43
  %v301 = vunpack.c.h.b16 %v43
  %v302 = vunpack.c.l.b16 %v44
  %v303 = vunpack.c.h.b16 %v44
  %v304 = vunpack.c.l.b16 %v45
  %v305 = vunpack.c.h.b16 %v45
  %v306 = vunpack.c.l.b16 %v46
  %v307 = vunpack.c.h.b16 %v46
  %v308 = vunpack.c.l.b16 %v47
  %v309 = vunpack.c.h.b16 %v47
  %v310 = vunpack.c.l.b16 %v48
  %v311 = vunpack.c.h.b16 %v48
  %v312 = vunpack.c.l.b16 %v49
  %v313 = vunpack.c.h.b16 %v49
  %v314 = vunpack.c.l.b16 %v50
  %v315 = vunpack.c.h.b16 %v50
  %v316 = vunpack.c.l.b16 %v51
  %v317 = vunpack.c.h.b16 %v51
  %v318 = vunpack.c.l.b16 %v52
  %v319 = vunpack.c.h.b16 %v52
  %v320 = vunpack.c.l.b16 %v53
  %v321 = vunpack.c.h.b16 %v53
  %v322 = vunpack.c.l.b16 %v54
  %v323 = vunpack.c.h.b16 %v54
  %v324 = vunpack.c.l.b16 %v55
  %v325 = vunpack.c.h.b16 %v55
  %v326 = vunpack.c.l.b16 %v56
  %v327 = vunpack.c.h.b16 %v56
  %v328 = vunpack.c.l.b16 %v57
  %v329 = vunpack.c.h.b16 %v57
  %v330 = vunpack.c.l.b16 %v58
  %v331 = vunpack.c.h.b16 %v58
  %v332 = vunpack.c.l.b16 %v59
  %v333 = vunpack.c.h.b16 %v59
  %v334 = vunpack.c.l.b16 %v60
  %v335 = vunpack.c.h.b16 %v60
  %v336 = vunpack.c.l.b16 %v61
  %v337 = vunpack.c.h.b16 %v61
  %v338 = vunpack.c.l.b16 %v62
  %v339 = vunpack.c.h.b16 %v62
  %v340 = vunpack.c.l.b16 %v63
  %v341 = vunpack.c.h.b16 %v63
  %v342 = vunpack.c.l.b16 %v64
  %v343 = vunpack.c.h.b16 %v64
  %v344 = vunpack.c.l.b16 %v65
  %v345 = vunpack.c.h.b16 %v65
  %v346 = vunpack.c.l.b16 %v66
  %v347 = vunpack.c.h.b16 %v66
  %v348 = vunpack.c.l.b16 %v67
  %v349 = vunpack.c.h.b16 %v67
  %v350 = vunpack.c.l.b16 %v68
  %v351 = vunpack.c.h.b16 %v68
  %v352 = vunpack.c.l.b16 %v69
  %v353 = vunpack.c.h.b16 %v69
  %v354 = vunpack.c.l.b16 %v70
  %v355 = vunpack.c.h.b16 %v70
  %v356 = vunpack.c.l.b16 %v71
  %v357 = vunpack.c.h.b16 %v71
  %v358 = vunpack.c.l.b16 %v72
  %v359 = vunpack.c.h.b16 %v72
  %v360 = vunpack.c.l.b16 %v73
  %v361 = vunpack.c.h.b16 %v73
  %v362 = vunpack.c.l.b16 %v74
  %v363 = vunpack.c.h.b16 %v74
  %v364 = vunpack.c.l.b16 %v75
  %v365 = vunpack.c.h.b16 %v75
  %v366 = vunpack.c.l.b16 %v76
  %v367 = vunpack.c.h.b16 %v76
  %v368 = vunpack.c.l.b16 %v77
  %v369 = vunpack.c.h.b16 %v77
  %v370 = vunpack.c.l.b16 %v78
  %v371 = vunpack.c.h.b16 %v78
  %v372 = vunpack.c.l.b16 %v79
  %v373 = vunpack.c.h.b16 %v79
  %v374 = vunpack.c.l.b16 %v80
  %v375 = vunpack.c.h.b16 %v80
  %v376 = vunpack.c.l.b16 %v81
  %v377 = vunpack.c.h.b16 %v81
  %v378 = vunpack.c.l.b16 %v82
  %v379 = vunpack.c.h.b16 %v82
  %v380 = vunpack.c.l.b16 %v83
  %v381 = vunpack.c.h.b16 %v83
  %v382 = vunpack.c.l.b16 %v84
  %v383 = vunpack.c.h.b16 %v84
  %v384 = vunpack.c.l.b16 %v85
  %v385 = vunpack.c.h.b16 %v85
  %v386 = vunpack.c.l.b16 %v86
  %v387 = vunpack.c.h.b16 %v86
  %v388 = vunpack.c.l.b16 %v87
  %v389 = vunpack.c.h.b16 %v87
  %v390 = vunpack.c.l.b16 %v88
  %v391 = vunpack.c.h.b16 %v88
  %v392 = vunpack.c.l.b16 %v89
  %v393 = vunpack.c.h.b16 %v89
  %v394 = vunpack.c.l.b16 %v90
  %v395 = vunpack.c.h.b16 %v90
  %v396 = vunpack.c.l.b16 %v91
  %v397 = vunpack.c.h.b16 %v91
  %v398 = vunpack.c.l.b16 %v92
  %v399 = vunpack.c.h.b16 %v92
  %v400 = vunpack.c.l.b16 %v93
  %v401 = vunpack.c.h.b16 %v93
  %v402 = vunpack.c.l.b16 %v94
  %v403 = vunpack.c.h.b16 %v94
  %v404 = vunpack.c.l.b16 %v95
  %v405 = vunpack.c.h.b16 %v95
  %v406 = vunpack.c.l.b16 %v96
  %v407 = vunpack.c.h.b16 %v96
  %v408 = vunpack.c.l.b16 %v97
  %v409 = vunpack.c.h.b16 %v97
  %v410 = vunpack.c.l.b16 %v98
  %v411 = vunpack.c.h.b16 %v98
  %v412 = vunpack.c.l.b16 %v99
  %v413 = vunpack.c.h.b16 %v99
  %v414 = vunpack.c.l.b16 %v100
  %v415 = vunpack.c.h.b16 %v100
  %v416 = vunpack.c.l.b16 %v101
  %v417 = vunpack.c.h.b16 %v101
  %v418 = vunpack.c.l.b16 %v102
  %v419 = vunpack.c.h.b16 %v102
  %v420 = vunpack.c.l.b16 %v103
  %v421 = vunpack.c.h.b16 %v103
  %v422 = vunpack.c.l.b16 %v104
  %v423 = vunpack.c.h.b16 %v104
  %v424 = vunpack.c.l.b16 %v105
  %v425 = vunpack.c.h.b16 %v105
  %v426 = vunpack.c.l.b16 %v106
  %v427 = vunpack.c.h.b16 %v106
  %v428 = vunpack.c.l.b16 %v107
  %v429 = vunpack.c.h.b16 %v107
  %v430 = vunpack.c.l.b16 %v108
  %v431 = vunpack.c.h.b16 %v108
  %v432 = vunpack.c.l.b16 %v109
  %v433 = vunpack.c.h.b16 %v109
  %v434 = vunpack.c.l.b16 %v110
  %v435 = vunpack.c.h.b16 %v110
  %v436 = vunpack.c.l.b16 %v111
  %v437 = vunpack.c.h.b16 %v111
  %v438 = vunpack.c.l.b16 %v112
  %v439 = vunpack.c.h.b16 %v112
  %v440 = vunpack.c.l.b16 %v113
  %v441 = vunpack.c.h.b16 %v113
  %v442 = vunpack.c.l.b16 %v114
  %v443 = vunpack.c.h.b16 %v114
  %v444 = vunpack.c.l.b16 %v115
  %v445 = vunpack.c.h.b16 %v115
  %v446 = vpack.c.b16 %v256, %v254
  %v447 = vpack.c.b16 %v257, %v255
  %v448 = vpack.c.b16 %v260, %v258
  %v449 = vpack.c.b16 %v261, %v259
  %v450 = vpack.c.b16 %v264, %v262
  %v451 = vpack.c.b16 %v265, %v263
  %v452 = vpack.c.b16 %v268, %v266
  %v453 = vpack.c.b16 %v269, %v267
  %v454 = vpack.c.b16 %v272, %v270
  %v455 = vpack.c.b16 %v273, %v271
  %v456 = vpack.c.b16 %v276, %v274
  %v457 = vpack.c.b16 %v277, %v275
  %v458 = vpack.c.b16 %v280, %v278
  %v459 = vpack.c.b16 %v281, %v279
  %v460 = vpack.c.b16 %v284, %v282
  %v461 = vpack.c.b16 %v285, %v283
  %v462 = vpack.c.b16 %v288, %v286
  %v463 = vpack.c.b16 %v289, %v287
  %v464 = vpack.c.b16 %v292, %v290
  %v465 = vpack.c.b16 %v293, %v291
  %v466 = vpack.c.b16 %v296, %v294
  %v467 = vpack.c.b16 %v297, %v295
  %v468 = vpack.c.b16 %v300, %v298
  %v469 = vpack.c.b16 %v301, %v299
  %v470 = vpack.c.b16 %v304, %v302
  %v471 = vpack.c.b16 %v305, %v303
  %v472 = vpack.c.b16 %v308, %v306
  %v473 = vpack.c.b16 %v309, %v307
  %v474 = vpack.c.b16 %v312, %v310
  %v475 = vpack.c.b16 %v313, %v311
  %v476 = vpack.c.b16 %v316, %v314
  %v477 = vpack.c.b16 %v317, %v315
  %v478 = vpack.c.b16 %v320, %v318
  %v479 = vpack.c.b16 %v321, %v319
  %v480 = vpack.c.b16 %v324, %v322
  %v481 = vpack.c.b16 %v325, %v323
  %v482 = vpack.c.b16 %v328, %v326
  %v483 = vpack.c.b16 %v329, %v327
  %v484 = vpack.c.b16 %v332, %v330
  %v485 = vpack.c.b16 %v333, %v331
  %v486 = vpack.c.b16 %v336, %v334
  %v487 = vpack.c.b16 %v337, %v335
  %v488 = vpack.c.b16 %v340, %v338
  %v489 = vpack.c.b16 %v341, %v339
  %v490 = vpack.c.b16 %v344, %v342
  %v491 = vpack.c.b16 %v345, %v343
  %v492 = vpack.c.b16 %v348, %v346
  %v493 = vpack.c.b16 %v349, %v347
  %v494 = vpack.c.b16 %v352, %v350
  %v495 = vpack.c.b16 %v353, %v351
  %v496 = vpack.c.b16 %v356, %v354
  %v497 = vpack.c.b16 %v357, %v355
  %v498 = vpack.c.b16 %v360, %v358
  %v499 = vpack.c.b16 %v361, %v359
  %v500 = vpack.c.b16 %v364, %v362
  %v501 = vpack.c.b16 %v365, %v363
  %v502 = vpack.c.b16 %v368, %v366
  %v503 = vpack.c.b16 %v369, %v367
  %v504 = vpack.c.b16 %v372, %v370
  %v505 = vpack.c.b16 %v373, %v371
  %v506 = vpack.c.b16 %v376, %v374
  %v507 = vpack.c.b16 %v377, %v375
  %v508 = vpack.c.b16 %v380, %v378
  %v509 = vpack.c.b16 %v381, %v379
  %v510 = vpack.c.b16 %v384, %v382
  %v511 = vpack.c.b16 %v385, %v383
  %v512 = vpack.c.b16 %v388, %v386
  %v513 = vpack.c.b16 %v389, %v387
  %v514 = vpack.c.b16 %v392, %v390
  %v515 = vpack.c.b16 %v393, %v391
  %v516 = vpack.c.b16 %v396, %v394
  %v517 = vpack.c.b16 %v397, %v395
  %v518 = vpack.c.b16 %v400, %v398
  %v519 = vpack.c.b16 %v401, %v399
  %v520 = vpack.c.b16 %v404, %v402
  %v521 = vpack.c.b16 %v405, %v403
  %v522 = vpack.c.b16 %v408, %v406
  %v523 = vpack.c.b16 %v409, %v407
  %v524 = vpack.c.b16 %v412, %v410
  %v525 = vpack.c.b16 %v413, %v411
  %v526 = vpack.c.b16 %v416, %v414
  %v527 = vpack.c.b16 %v417, %v415
  %v528 = vpack.c.b16 %v420, %v418
  %v529 = vpack.c.b16 %v421, %v419
  %v530 = vpack.c.b16 %v424, %v422
  %v531 = vpack.c.b16 %v425, %v423
  %v532 = vpack.c.b16 %v428, %v426
  %v533 = vpack.c.b16 %v429, %v427
  %v534 = vpack.c.b16 %v432, %v430
  %v535 = vpack.c.b16 %v433, %v431
  %v536 = vpack.c.b16 %v436, %v434
  %v537 = vpack.c.b16 %v437, %v435
  %v538 = vpack.c.b16 %v440, %v438
  %v539 = vpack.c.b16 %v441, %v439
  %v540 = vpack.c.b16 %v444, %v442
  %v541 = vpack.c.b16 %v445, %v443
  %638 = vmatprep.subr.bf16.mxu0 %v447
  %639 = vmatpush1.bf16.msra.mxu0 %v446
  %640 = vmatprep.subr.bf16.mxu0 %v449
  %641 = vmatpush1.bf16.msra.mxu0 %v448
  %642 = vmatprep.subr.bf16.mxu0 %v451
  %643 = vmatpush1.bf16.msra.mxu0 %v450
  %644 = vmatprep.subr.bf16.mxu0 %v453
  %645 = vmatpush1.bf16.msra.mxu0 %v452
  %646 = vmatprep.subr.bf16.mxu0 %v455
  %647 = vmatpush1.bf16.msra.mxu0 %v454
  %648 = vmatprep.subr.bf16.mxu0 %v457
  %649 = vmatpush1.bf16.msra.mxu0 %v456
  %650 = vmatprep.subr.bf16.mxu0 %v459
  %651 = vmatpush1.bf16.msra.mxu0 %v458
  %652 = vmatprep.subr.bf16.mxu0 %v461
  %653 = vmatpush1.bf16.msra.mxu0 %v460
  %654 = vmatprep.subr.bf16.mxu0 %v463
  %655 = vmatpush1.bf16.msra.mxu0 %v462
  %656 = vmatprep.subr.bf16.mxu0 %v465
  %657 = vmatpush1.bf16.msra.mxu0 %v464
  %658 = vmatprep.subr.bf16.mxu0 %v467
  %659 = vmatpush1.bf16.msra.mxu0 %v466
  %660 = vmatprep.subr.bf16.mxu0 %v469
  %661 = vmatpush1.bf16.msra.mxu0 %v468
  %662 = vmatprep.subr.bf16.mxu0 %v471
  %663 = vmatpush1.bf16.msra.mxu0 %v470
  %664 = vmatprep.subr.bf16.mxu0 %v473
  %665 = vmatpush1.bf16.msra.mxu0 %v472
  %666 = vmatprep.subr.bf16.mxu0 %v475
  %667 = vmatpush1.bf16.msra.mxu0 %v474
  %668 = vmatprep.subr.bf16.mxu0 %v477
  %669 = vmatpush1.bf16.msra.mxu0 %v476
  %670 = vmatprep.mubr.bf16.mxu0 %v147
  %671 = vmatmul.mubr.bf16.gmra.mrb[0].mxu0 %v146
  %v672 = vpop.f32.mrb[0].mxu0
  %v673 = vadd.f32 %v121, %v672
  %v674 = vpop.f32.mrb[0].mxu0
  %v675 = vadd.f32 %v121, %v674
  %v676 = vpop.f32.mrb[0].mxu0
  %v677 = vadd.f32 %v126, %v676
  %v678 = vpop.f32.mrb[0].mxu0
  %v679 = vadd.f32 %v126, %v678
  %680 = vdwg.mxu0
  %681 = vmatprep.subr.bf16.mxu0 %v479
  %682 = vmatpush1.bf16.msra.mxu0 %v478
  %683 = vmatprep.subr.bf16.mxu0 %v481
  %684 = vmatpush1.bf16.msra.mxu0 %v480
  %685 = vmatprep.subr.bf16.mxu0 %v483
  %686 = vmatpush1.bf16.msra.mxu0 %v482
  %687 = vmatprep.subr.bf16.mxu0 %v485
  %688 = vmatpush1.bf16.msra.mxu0 %v484
  %689 = vmatprep.subr.bf16.mxu0 %v487
  %690 = vmatpush1.bf16.msra.mxu0 %v486
  %691 = vmatprep.subr.bf16.mxu0 %v489
  %692 = vmatpush1.bf16.msra.mxu0 %v488
  %693 = vmatprep.subr.bf16.mxu0 %v491
  %694 = vmatpush1.bf16.msra.mxu0 %v490
  %695 = vmatprep.subr.bf16.mxu0 %v493
  %696 = vmatpush1.bf16.msra.mxu0 %v492
  %697 = vmatprep.subr.bf16.mxu0 %v495
  %698 = vmatpush1.bf16.msra.mxu0 %v494
  %699 = vmatprep.subr.bf16.mxu0 %v497
  %700 = vmatpush1.bf16.msra.mxu0 %v496
  %701 = vmatprep.subr.bf16.mxu0 %v499
  %702 = vmatpush1.bf16.msra.mxu0 %v498
  %703 = vmatprep.subr.bf16.mxu0 %v501
  %704 = vmatpush1.bf16.msra.mxu0 %v500
  %705 = vmatprep.subr.bf16.mxu0 %v503
  %706 = vmatpush1.bf16.msra.mxu0 %v502
  %707 = vmatprep.subr.bf16.mxu0 %v505
  %708 = vmatpush1.bf16.msra.mxu0 %v504
  %709 = vmatprep.subr.bf16.mxu0 %v507
  %710 = vmatpush1.bf16.msra.mxu0 %v506
  %711 = vmatprep.subr.bf16.mxu0 %v509
  %712 = vmatpush1.bf16.msra.mxu0 %v508
  %713 = vmatprep.mubr.bf16.mxu0 %v149
  %714 = vmatmul.mubr.bf16.gmra.mrb[0].mxu0 %v148
  %v715 = vpop.f32.mrb[0].mxu0
  %v716 = vadd.f32 %v673, %v715
  %v717 = vpop.f32.mrb[0].mxu0
  %v718 = vadd.f32 %v675, %v717
  %v719 = vpop.f32.mrb[0].mxu0
  %v720 = vadd.f32 %v677, %v719
  %v721 = vpop.f32.mrb[0].mxu0
  %v722 = vadd.f32 %v679, %v721
  %723 = vdwg.mxu0
  %724 = vmatprep.subr.bf16.mxu0 %v511
  %725 = vmatpush1.bf16.msra.mxu0 %v510
  %726 = vmatprep.subr.bf16.mxu0 %v513
  %727 = vmatpush1.bf16.msra.mxu0 %v512
  %728 = vmatprep.subr.bf16.mxu0 %v515
  %729 = vmatpush1.bf16.msra.mxu0 %v514
  %730 = vmatprep.subr.bf16.mxu0 %v517
  %731 = vmatpush1.bf16.msra.mxu0 %v516
  %732 = vmatprep.subr.bf16.mxu0 %v519
  %733 = vmatpush1.bf16.msra.mxu0 %v518
  %734 = vmatprep.subr.bf16.mxu0 %v521
  %735 = vmatpush1.bf16.msra.mxu0 %v520
  %736 = vmatprep.subr.bf16.mxu0 %v523
  %737 = vmatpush1.bf16.msra.mxu0 %v522
  %738 = vmatprep.subr.bf16.mxu0 %v525
  %739 = vmatpush1.bf16.msra.mxu0 %v524
  %740 = vmatprep.subr.bf16.mxu0 %v527
  %741 = vmatpush1.bf16.msra.mxu0 %v526
  %742 = vmatprep.subr.bf16.mxu0 %v529
  %743 = vmatpush1.bf16.msra.mxu0 %v528
  %744 = vmatprep.subr.bf16.mxu0 %v531
  %745 = vmatpush1.bf16.msra.mxu0 %v530
  %746 = vmatprep.subr.bf16.mxu0 %v533
  %747 = vmatpush1.bf16.msra.mxu0 %v532
  %748 = vmatprep.subr.bf16.mxu0 %v535
  %749 = vmatpush1.bf16.msra.mxu0 %v534
  %750 = vmatprep.subr.bf16.mxu0 %v537
  %751 = vmatpush1.bf16.msra.mxu0 %v536
  %752 = vmatprep.subr.bf16.mxu0 %v539
  %753 = vmatpush1.bf16.msra.mxu0 %v538
  %754 = vmatprep.subr.bf16.mxu0 %v541
  %755 = vmatpush1.bf16.msra.mxu0 %v540
  %756 = vmatprep.mubr.bf16.mxu0 %v151
  %757 = vmatmul.mubr.bf16.gmra.mrb[0].mxu0 %v150
  %v758 = vpop.f32.mrb[0].mxu0
  %v759 = vadd.f32 %v716, %v758
  %v760 = vpop.f32.mrb[0].mxu0
  %v761 = vadd.f32 %v718, %v760
  %v762 = vpop.f32.mrb[0].mxu0
  %v763 = vadd.f32 %v720, %v762
  %v764 = vpop.f32.mrb[0].mxu0
  %v765 = vadd.f32 %v722, %v764
  %766 = vdwg.mxu0
  %v767 = vmax.f32 %v759, 0.0
  %v768 = vmax.f32 %v761, 0.0
  %v769 = vmax.f32 %v763, 0.0
  %v770 = vmax.f32 %v765, 0.0
  %v771 = vpack.c.bf16 %v769, %v767
  %v772 = vpack.c.bf16 %v770, %v768
  %v775 = vunpack.c.l.b16 %v771
  %v776 = vunpack.c.l.b16 %v772
  %v777 = vunpack.c.h.b16 %v771
  %v778 = vunpack.c.h.b16 %v772
  %v779 = vpack.c.b16 %v776, %v775
  %v780 = vpack.c.b16 %v778, %v777
  %783 = vst [vmem:[%s3] sm:$0xff] %v779
  %vm784 = vcmask 1040384
  %vm785 = vsmask.f32 256
  %vm786 = vmand %vm784, %vm785
  %vm787 = vcmask 1044484
  %vm788 = vsmask.f32 4352
  %vm789 = vmand %vm787, %vm788
  %vm790 = vmor %vm789, %vm786
  %v791 = vld [vmem:[%s3 + $0x8] sm:$0x11]
  %v792 = vsel %vm790, %v780, %v791
  %793 = vst [vmem:[%s3 + $0x8] sm:$0x11] %v792
  // Predicated region
  $region14: #{student_net2_forward.3} parent=0 // pred_check
    _
  $region15: #{student_net2_forward.3} parent=0 // pred_check_branch
    %795 = sbr.rel (0) target = $region17
  $region16: #{student_net2_forward.3} parent=0 // pred_region
    _
  $region17: #{student_net2_forward.3} parent=0 // pred_fallthru
    _
  // Predicated region
  $region18: #{student_net2_forward.3} parent=0 // pred_check
    _
  $region19: #{student_net2_forward.3} parent=0 // pred_check_branch
    %797 = sbr.rel (0) target = $region21
  $region20: #{student_net2_forward.3} parent=0 // pred_region
    _
  $region21: #{student_net2_forward.3} parent=0 // pred_fallthru
    _

</llo_original>
